<compile_context>
chip_gen: v7x
topology: tpu7x:2x2x1
jax: 0.10.0
libtpu: 0.0.40
codegen_flags: <defaults>
</compile_context>

<pallas_src>
from itertools import permutations
import functools

import jax
import jax.numpy as jnp
from jax.experimental import pallas as pl
from jax.experimental.pallas import tpu as pltpu

LOG_SIG_MIN = -20.0
LOG_SIG_MAX = 2.0


def _round_up(x, m):
    return (x + m - 1) // m * m


def _actor_kernel(pairs, TB, db, do, nb, dim_act,
                  obs_ref, lemb_ref,
                  w_lemb_ref, w_body_ref, w_ab_ref, pair_bias_ref,
                  pw2_ref, pb2_ref, rw1_ref, rb1_ref, rw2_ref, rb2_ref,
                  w_head_ref, b_head_ref,
                  out_ref,
                  obj_scr, ab_scr, h1_scr):
    H = pw2_ref.shape[0]          # phi hidden width (256)
    P = len(pairs)                # number of ordered object pairs

    def mm(x, w_ref):
        # Cast the activation to the (possibly bf16) weight dtype at the MXU input only;
        # accumulation and all element-wise math stay f32 (safe on v5e's f32-only VPU/EUP).
        return jnp.dot(x.astype(w_ref.dtype), w_ref[...],
                       preferred_element_type=jnp.float32)

    # ---- phi layer 1 (factored) ----
    # shared (l_emb | obs_body) contribution: identical for every permutation, computed once.
    shared = mm(lemb_ref[...], w_lemb_ref) + mm(obs_ref[:, :db], w_body_ref)        # (TB, H)

    # per-object feature slabs cut straight out of the raw obs tile, stacked object-major
    # along sublanes, then ONE matmul produces both the "a"-slot and "b"-slot contributions.
    for i in range(nb):
        obj_scr[i * TB:(i + 1) * TB, :] = (
            obs_ref[:, db + i * do: db + (i + 1) * do].astype(jnp.float32))
    ab_scr[...] = mm(obj_scr[...], w_ab_ref)                                         # (nb*TB, 2H)

    # h1 for all P pairs written into one stacked scratch; one-hot rows of phi_w1 and
    # phi_b1 are folded into the precomputed per-pair bias.
    for p, (a, b) in enumerate(pairs):
        h1_scr[p * TB:(p + 1) * TB, :] = jnp.maximum(
            shared
            + ab_scr[a * TB:(a + 1) * TB, :H]
            + ab_scr[b * TB:(b + 1) * TB, H:]
            + pair_bias_ref[p:p + 1, :],
            0.0)

    # ---- phi layer 2: ONE fused matmul over all pairs, then reduce the P row blocks ----
    h2 = jnp.maximum(mm(h1_scr[...], pw2_ref) + pb2_ref[...], 0.0)                   # (P*TB, Dphi)
    acc = h2[0:TB, :]
    for p in range(1, P):
        acc = acc + h2[p * TB:(p + 1) * TB, :]

    # ---- rho MLP + fused (mean | logstd | zero-pad) head, lane-dense 128-wide store ----
    r = jnp.maximum(mm(acc, rw1_ref) + rb1_ref[...], 0.0)                            # (TB, 256)
    r = jnp.maximum(mm(r, rw2_ref) + rb2_ref[...], 0.0)                              # (TB, 256)
    heads = mm(r, w_head_ref) + b_head_ref[...]                                      # (TB, 128)

    # clamp only the logstd lanes (mean lanes < dim_act; pad lanes are zero and harmless).
    lane = jax.lax.broadcasted_iota(jnp.int32, heads.shape, 1)
    clipped = jnp.clip(heads, LOG_SIG_MIN, LOG_SIG_MAX)
    out_ref[...] = jnp.where(lane >= dim_act, clipped, heads)


def factor_params(params, *, nb_objects, dim_body, dim_object, dim_l_emb,
                  weights_dtype=jnp.float32):
    """One-time re-layout of the PyTorch-style parameters for the factored kernel.

    weights_dtype=jnp.bfloat16 halves the weight HBM->VMEM DMA on every generation
    (including v5e, whose MXU takes bf16 natively); biases stay f32 and accumulation
    is always f32.
    """
    nb, do, db, dl = nb_objects, dim_object, dim_body, dim_l_emb
    pw1 = params["phi_w1"]                                   # (Din, H), Din = dl+db+2*(nb+do)
    H = pw1.shape[1]
    d_sh = dl + db
    w_lemb = pw1[:dl]                                        # l_emb rows
    w_body = pw1[dl:d_sh]                                    # obs_body rows
    w_a = pw1[d_sh:d_sh + nb + do]                           # first-object slot rows
    w_b = pw1[d_sh + nb + do:]                               # second-object slot rows
    w_ab = jnp.concatenate([w_a[nb:], w_b[nb:]], axis=1)     # (do, 2H): [a-feat | b-feat]

    # Fold the one-hot rows + phi_b1 into a per-pair bias: never touches the MXU.
    pairs = tuple(permutations(range(nb), 2))
    pb1 = params["phi_b1"][0]                                # (H,)
    pair_bias = jnp.stack([pb1 + w_a[a] + w_b[b] for (a, b) in pairs], axis=0)   # (P, H)

    # Fused mean/logstd head, zero-padded to a lane-dense (multiple of 128) output width.
    dim_act = params["w_mean"].shape[1]
    head_pad = max(128, _round_up(2 * dim_act, 128))
    w_head = jnp.zeros((H, head_pad), jnp.float32)
    w_head = w_head.at[:, :dim_act].set(params["w_mean"])
    w_head = w_head.at[:, dim_act:2 * dim_act].set(params["w_logstd"])
    b_head = jnp.zeros((1, head_pad), jnp.float32)
    b_head = b_head.at[:, :dim_act].set(params["b_mean"])
    b_head = b_head.at[:, dim_act:2 * dim_act].set(params["b_logstd"])

    fparams = dict(
        w_lemb=w_lemb.astype(weights_dtype),
        w_body=w_body.astype(weights_dtype),
        w_ab=w_ab.astype(weights_dtype),
        pair_bias=pair_bias,                                  # biases stay f32
        pw2=params["phi_w2"].astype(weights_dtype), pb2=params["phi_b2"],
        rw1=params["rho_w1"].astype(weights_dtype), rb1=params["rho_b1"],
        rw2=params["rho_w2"].astype(weights_dtype), rb2=params["rho_b2"],
        w_head=w_head.astype(weights_dtype), b_head=b_head,
    )
    meta = dict(nb=nb, db=db, do=do, dl=dl, H=H, dim_act=dim_act,
                head_pad=head_pad, pairs=pairs)
    return fparams, meta


def language_actor_forward(obs, l_emb, fparams, meta, *,
                           nb_objects, dim_body, dim_object, batch_tile=256):
    """The whole DeepSets-actor MLP hot path runs in one batch-tiled Pallas kernel."""
    B = obs.shape[0]
    assert l_emb.shape[0] == B
    nb, db, do, dl = meta["nb"], meta["db"], meta["do"], meta["dl"]
    # Static consistency checks (kernel slicing silently depends on these).
    assert (nb, db, do) == (nb_objects, dim_body, dim_object)
    assert l_emb.shape[1] == dl
    dim_obs = db + nb * do
    assert obs.shape[1] == dim_obs

    H, dim_act, head_pad = meta["H"], meta["dim_act"], meta["head_pad"]
    pairs = meta["pairs"]
    P = len(pairs)
    assert fparams["pair_bias"].shape == (P, H)

    # Batch tile: multiple of 16 (bf16 sublane packing), capped at 512 rows so the per-tile
    # live set (obj/ab/h1 scratch + resident weights + double-buffered IO blocks) fits
    # comfortably in v7x's 64 MiB VMEM and under v5e's 16 MiB scoped default.
    TB = min(max(int(batch_tile), 16), 512)
    TB = _round_up(TB, 16)
    TB = min(TB, _round_up(B, 16))
    Bp = _round_up(B, TB)
    if Bp != B:  # pad only when needed; padded rows are zero and sliced off below
        obs = jnp.pad(obs, ((0, Bp - B), (0, 0)))
        l_emb = jnp.pad(l_emb, ((0, Bp - B), (0, 0)))

    kernel = functools.partial(_actor_kernel, pairs, TB, db, do, nb, dim_act)

    weights = [fparams[k] for k in
               ("w_lemb", "w_body", "w_ab", "pair_bias", "pw2", "pb2",
                "rw1", "rb1", "rw2", "rb2", "w_head", "b_head")]

    batch_map = lambda i: (i, 0)
    const_map = lambda i: (0, 0)          # weights: same block every step -> VMEM-resident
    in_specs = [pl.BlockSpec((TB, dim_obs), batch_map),
                pl.BlockSpec((TB, dl), batch_map)]
    in_specs += [pl.BlockSpec(w.shape, const_map) for w in weights]

    dphi = fparams["pw2"].shape[1]
    flops = 2 * Bp * ((dl + db) * H + nb * do * 2 * H + P * H * dphi
                      + dphi * H + H * H + H * head_pad)
    bytes_accessed = (sum(int(w.size) * w.dtype.itemsize for w in weights)
                      + int(obs.size) * obs.dtype.itemsize
                      + int(l_emb.size) * l_emb.dtype.itemsize
                      + Bp * head_pad * 4)

    out = pl.pallas_call(
        kernel,
        out_shape=jax.ShapeDtypeStruct((Bp, head_pad), jnp.float32),
        grid_spec=pltpu.PrefetchScalarGridSpec(
            num_scalar_prefetch=0,
            grid=(Bp // TB,),
            in_specs=in_specs,
            out_specs=pl.BlockSpec((TB, head_pad), batch_map),
            scratch_shapes=[pltpu.VMEM((nb * TB, do), jnp.float32),      # stacked obj feats
                            pltpu.VMEM((nb * TB, 2 * H), jnp.float32),   # a/b slot contribs
                            pltpu.VMEM((P * TB, H), jnp.float32)]),      # stacked h1
        compiler_params=pltpu.CompilerParams(
            dimension_semantics=("parallel",),
            vmem_limit_bytes=32 * 1024 * 1024),
        cost_estimate=pl.CostEstimate(flops=int(flops), transcendentals=0,
                                      bytes_accessed=int(bytes_accessed)),
    )(obs, l_emb, *weights)

    mean = out[:B, :dim_act]
    logstd = out[:B, dim_act:2 * dim_act]
    return mean, logstd


def reference_forward(obs, l_emb, params, *, nb_objects, dim_body, dim_object):
    """Pure-JAX, unfactored reference mirroring the PyTorch module op-for-op."""
    B = obs.shape[0]
    obs_body = obs[:, :dim_body]
    eye = jnp.eye(nb_objects, dtype=obs.dtype)
    obs_objects = []
    for i in range(nb_objects):
        one_hot = jnp.broadcast_to(eye[i], (B, nb_objects))
        feats = obs[:, dim_body + dim_object * i: dim_body + dim_object * (i + 1)]
        obs_objects.append(jnp.concatenate([one_hot, feats], axis=1))
    x = jnp.stack([jnp.concatenate([l_emb, obs_body, obs_objects[a], obs_objects[b]], axis=1)
                   for (a, b) in permutations(range(nb_objects), 2)], axis=0)
    h = jax.nn.relu(x @ params["phi_w1"] + params["phi_b1"])
    h = jax.nn.relu(h @ params["phi_w2"] + params["phi_b2"])
    s = h.sum(axis=0)
    r = jax.nn.relu(s @ params["rho_w1"] + params["rho_b1"])
    r = jax.nn.relu(r @ params["rho_w2"] + params["rho_b2"])
    mean = r @ params["w_mean"] + params["b_mean"]
    logstd = jnp.clip(r @ params["w_logstd"] + params["b_logstd"], LOG_SIG_MIN, LOG_SIG_MAX)
    return mean, logstd


def _init_linear(key, fan_in, fan_out):
    """PyTorch nn.Linear default init: U(-1/sqrt(fan_in), 1/sqrt(fan_in)). Weights stored (in, out)."""
    kw, kb = jax.random.split(key)
    bound = 1.0 / jnp.sqrt(fan_in)
    w = jax.random.uniform(kw, (fan_in, fan_out), jnp.float32, -bound, bound)
    b = jax.random.uniform(kb, (1, fan_out), jnp.float32, -bound, bound)
    return w, b


if __name__ == "__main__":
    # ---- module hyper-parameters (small, consistent with the forward pass) ----
    nb_objects = 3
    dim_body = 10
    dim_object = 15
    dim_l_emb = 8
    dim_phi_actor_input = dim_l_emb + dim_body + 2 * (nb_objects + dim_object)   # 54
    dim_phi_actor_output = 64
    dim_rho_actor_output = 4          # action dim
    hidden = 256
    batch = 8

    key = jax.random.PRNGKey(0)
    keys = jax.random.split(key, 10)

    # ---- deterministic parameter init (PyTorch-style layout) ----
    phi_w1, phi_b1 = _init_linear(keys[0], dim_phi_actor_input, hidden)
    phi_w2, phi_b2 = _init_linear(keys[1], hidden, dim_phi_actor_output)
    rho_w1, rho_b1 = _init_linear(keys[2], dim_phi_actor_output, hidden)
    rho_w2, rho_b2 = _init_linear(keys[3], hidden, hidden)
    w_mean, b_mean = _init_linear(keys[4], hidden, dim_rho_actor_output)
    w_logstd, b_logstd = _init_linear(keys[5], hidden, dim_rho_actor_output)

    params = dict(phi_w1=phi_w1, phi_b1=phi_b1, phi_w2=phi_w2, phi_b2=phi_b2,
                  rho_w1=rho_w1, rho_b1=rho_b1, rho_w2=rho_w2, rho_b2=rho_b2,
                  w_mean=w_mean, b_mean=b_mean, w_logstd=w_logstd, b_logstd=b_logstd)

    # ---- deterministic example inputs ----
    obs = jax.random.normal(keys[6], (batch, dim_body + nb_objects * dim_object), jnp.float32)
    l_emb = jax.random.normal(keys[7], (batch, dim_l_emb), jnp.float32)

    mean_ref, logstd_ref = reference_forward(
        obs, l_emb, params,
        nb_objects=nb_objects, dim_body=dim_body, dim_object=dim_object)

    # ---- f32 weights: exact semantics (single-tile grid) ----
    fparams, meta = factor_params(
        params, nb_objects=nb_objects, dim_body=dim_body, dim_object=dim_object,
        dim_l_emb=dim_l_emb, weights_dtype=jnp.float32)
    mean, logstd = language_actor_forward(
        obs, l_emb, fparams, meta,
        nb_objects=nb_objects, dim_body=dim_body, dim_object=dim_object)
    jax.block_until_ready((mean, logstd))

    assert mean.shape == (batch, dim_rho_actor_output)
    assert logstd.shape == (batch, dim_rho_actor_output)
    assert bool(jnp.all(jnp.isfinite(mean))) and bool(jnp.all(jnp.isfinite(logstd)))
    assert bool(jnp.all(logstd <= LOG_SIG_MAX)) and bool(jnp.all(logstd >= LOG_SIG_MIN))
    assert bool(jnp.allclose(mean, mean_ref, atol=2e-2, rtol=2e-2))
    assert bool(jnp.allclose(logstd, logstd_ref, atol=2e-2, rtol=2e-2))

    # ---- multi-tile grid: exercises batch tiling, padding and VMEM-resident weights ----
    batch2 = 40
    obs2 = jax.random.normal(keys[8], (batch2, dim_body + nb_objects * dim_object), jnp.float32)
    l_emb2 = jax.random.normal(keys[9], (batch2, dim_l_emb), jnp.float32)
    mean2_ref, logstd2_ref = reference_forward(
        obs2, l_emb2, params,
        nb_objects=nb_objects, dim_body=dim_body, dim_object=dim_object)
    mean2, logstd2 = language_actor_forward(
        obs2, l_emb2, fparams, meta,
        nb_objects=nb_objects, dim_body=dim_body, dim_object=dim_object, batch_tile=16)
    jax.block_until_ready((mean2, logstd2))
    assert mean2.shape == (batch2, dim_rho_actor_output)
    assert bool(jnp.allclose(mean2, mean2_ref, atol=2e-2, rtol=2e-2))
    assert bool(jnp.allclose(logstd2, logstd2_ref, atol=2e-2, rtol=2e-2))

    # ---- bf16-stored weights (halves weight DMA on every TPU generation; f32 accumulation) ----
    fparams_b, meta_b = factor_params(
        params, nb_objects=nb_objects, dim_body=dim_body, dim_object=dim_object,
        dim_l_emb=dim_l_emb, weights_dtype=jnp.bfloat16)
    mean_b, logstd_b = language_actor_forward(
        obs, l_emb, fparams_b, meta_b,
        nb_objects=nb_objects, dim_body=dim_body, dim_object=dim_object)
    jax.block_until_ready((mean_b, logstd_b))
    assert bool(jnp.allclose(mean_b, mean_ref, atol=1e-1, rtol=1e-1))
    assert bool(jnp.allclose(logstd_b, logstd_ref, atol=1e-1, rtol=1e-1))

    print("KERNEL_OK")
</pallas_src>

<mosaic_0001>
module attributes {stable_mosaic.version = 11 : i64} {
  func.func @_actor_kernel(%arg0: i32, %arg1: memref<16x55xf32, #tpu.memory_space<vmem>>, %arg2: memref<16x8xf32, #tpu.memory_space<vmem>>, %arg3: memref<8x256xf32, #tpu.memory_space<vmem>>, %arg4: memref<10x256xf32, #tpu.memory_space<vmem>>, %arg5: memref<15x512xf32, #tpu.memory_space<vmem>>, %arg6: memref<6x256xf32, #tpu.memory_space<vmem>>, %arg7: memref<256x64xf32, #tpu.memory_space<vmem>>, %arg8: memref<1x64xf32, #tpu.memory_space<vmem>>, %arg9: memref<64x256xf32, #tpu.memory_space<vmem>>, %arg10: memref<1x256xf32, #tpu.memory_space<vmem>>, %arg11: memref<256x256xf32, #tpu.memory_space<vmem>>, %arg12: memref<1x256xf32, #tpu.memory_space<vmem>>, %arg13: memref<256x128xf32, #tpu.memory_space<vmem>>, %arg14: memref<1x128xf32, #tpu.memory_space<vmem>>, %arg15: memref<16x128xf32, #tpu.memory_space<vmem>>, %arg16: memref<48x15xf32, #tpu.memory_space<vmem>>, %arg17: memref<48x512xf32, #tpu.memory_space<vmem>>, %arg18: memref<96x256xf32, #tpu.memory_space<vmem>>) attributes {dimension_semantics = [#tpu.dimension_semantics<parallel>], iteration_bounds = array<i64: 1>, scalar_prefetch = 0 : i64, scratch_operands = 3 : i64, tpu.core_type = #tpu.core_type<tc>, window_params = [{transform_indices = @transform_0, window_bounds = array<i64: 16, 55>}, {transform_indices = @transform_1, window_bounds = array<i64: 16, 8>}, {pipeline_mode = #tpu.pipeline_mode<synchronous>, transform_indices = @transform_2, window_bounds = array<i64: 8, 256>}, {pipeline_mode = #tpu.pipeline_mode<synchronous>, transform_indices = @transform_3, window_bounds = array<i64: 10, 256>}, {pipeline_mode = #tpu.pipeline_mode<synchronous>, transform_indices = @transform_4, window_bounds = array<i64: 15, 512>}, {pipeline_mode = #tpu.pipeline_mode<synchronous>, transform_indices = @transform_5, window_bounds = array<i64: 6, 256>}, {pipeline_mode = #tpu.pipeline_mode<synchronous>, transform_indices = @transform_6, window_bounds = array<i64: 256, 64>}, {pipeline_mode = #tpu.pipeline_mode<synchronous>, transform_indices = @transform_7, window_bounds = array<i64: 1, 64>}, {pipeline_mode = #tpu.pipeline_mode<synchronous>, transform_indices = @transform_8, window_bounds = array<i64: 64, 256>}, {pipeline_mode = #tpu.pipeline_mode<synchronous>, transform_indices = @transform_9, window_bounds = array<i64: 1, 256>}, {pipeline_mode = #tpu.pipeline_mode<synchronous>, transform_indices = @transform_10, window_bounds = array<i64: 256, 256>}, {pipeline_mode = #tpu.pipeline_mode<synchronous>, transform_indices = @transform_11, window_bounds = array<i64: 1, 256>}, {pipeline_mode = #tpu.pipeline_mode<synchronous>, transform_indices = @transform_12, window_bounds = array<i64: 256, 128>}, {pipeline_mode = #tpu.pipeline_mode<synchronous>, transform_indices = @transform_13, window_bounds = array<i64: 1, 128>}, {transform_indices = @transform_14, window_bounds = array<i64: 16, 128>}]} {
    %c0 = arith.constant 0 : index
    %c0_0 = arith.constant 0 : index
    %0 = vector.load %arg2[%c0, %c0_0] : memref<16x8xf32, #tpu.memory_space<vmem>>, vector<16x8xf32>
    %c0_1 = arith.constant 0 : index
    %c0_2 = arith.constant 0 : index
    %1 = vector.load %arg3[%c0_1, %c0_2] : memref<8x256xf32, #tpu.memory_space<vmem>>, vector<8x256xf32>
    %cst = arith.constant dense<0.000000e+00> : vector<16x256xf32>
    %2 = tpu.matmul %0, %1, %cst {dimension_numbers = #tpu.dot_dimension_numbers<[1], [0], [0], [1], [0, 0, 1, 1], [], []>} : vector<16x8xf32>, vector<8x256xf32>, vector<16x256xf32> -> vector<16x256xf32>
    %c0_3 = arith.constant 0 : index
    %c0_4 = arith.constant 0 : index
    %3 = vector.load %arg1[%c0_3, %c0_4] : memref<16x55xf32, #tpu.memory_space<vmem>>, vector<16x10xf32>
    %c0_5 = arith.constant 0 : index
    %c0_6 = arith.constant 0 : index
    %4 = vector.load %arg4[%c0_5, %c0_6] : memref<10x256xf32, #tpu.memory_space<vmem>>, vector<10x256xf32>
    %cst_7 = arith.constant dense<0.000000e+00> : vector<16x256xf32>
    %5 = tpu.matmul %3, %4, %cst_7 {dimension_numbers = #tpu.dot_dimension_numbers<[1], [0], [0], [1], [0, 0, 1, 1], [], []>} : vector<16x10xf32>, vector<10x256xf32>, vector<16x256xf32> -> vector<16x256xf32>
    %6 = arith.addf %2, %5 : vector<16x256xf32>
    %c0_8 = arith.constant 0 : index
    %c10 = arith.constant 10 : index
    %7 = vector.load %arg1[%c0_8, %c10] : memref<16x55xf32, #tpu.memory_space<vmem>>, vector<16x15xf32>
    %c0_9 = arith.constant 0 : index
    %c0_10 = arith.constant 0 : index
    %8 = vector.load %arg16[%c0_9, %c0_10] : memref<48x15xf32, #tpu.memory_space<vmem>>, vector<16x15xf32>
    tpu.vector_store %arg16[%c0_9, %c0_10], %7 {strides = array<i32>} : memref<48x15xf32, #tpu.memory_space<vmem>>, vector<16x15xf32>,
    %c0_11 = arith.constant 0 : index
    %c25 = arith.constant 25 : index
    %9 = vector.load %arg1[%c0_11, %c25] : memref<16x55xf32, #tpu.memory_space<vmem>>, vector<16x15xf32>
    %c16 = arith.constant 16 : index
    %c0_12 = arith.constant 0 : index
    %10 = vector.load %arg16[%c16, %c0_12] : memref<48x15xf32, #tpu.memory_space<vmem>>, vector<16x15xf32>
    tpu.vector_store %arg16[%c16, %c0_12], %9 {strides = array<i32>} : memref<48x15xf32, #tpu.memory_space<vmem>>, vector<16x15xf32>,
    %c0_13 = arith.constant 0 : index
    %c40 = arith.constant 40 : index
    %11 = vector.load %arg1[%c0_13, %c40] : memref<16x55xf32, #tpu.memory_space<vmem>>, vector<16x15xf32>
    %c32 = arith.constant 32 : index
    %c0_14 = arith.constant 0 : index
    %12 = vector.load %arg16[%c32, %c0_14] : memref<48x15xf32, #tpu.memory_space<vmem>>, vector<16x15xf32>
    tpu.vector_store %arg16[%c32, %c0_14], %11 {strides = array<i32>} : memref<48x15xf32, #tpu.memory_space<vmem>>, vector<16x15xf32>,
    %c0_15 = arith.constant 0 : index
    %c0_16 = arith.constant 0 : index
    %13 = vector.load %arg16[%c0_15, %c0_16] : memref<48x15xf32, #tpu.memory_space<vmem>>, vector<48x15xf32>
    %c0_17 = arith.constant 0 : index
    %c0_18 = arith.constant 0 : index
    %14 = vector.load %arg5[%c0_17, %c0_18] : memref<15x512xf32, #tpu.memory_space<vmem>>, vector<15x512xf32>
    %cst_19 = arith.constant dense<0.000000e+00> : vector<48x512xf32>
    %15 = tpu.matmul %13, %14, %cst_19 {dimension_numbers = #tpu.dot_dimension_numbers<[1], [0], [0], [1], [0, 0, 1, 1], [], []>} : vector<48x15xf32>, vector<15x512xf32>, vector<48x512xf32> -> vector<48x512xf32>
    %c0_20 = arith.constant 0 : index
    %c0_21 = arith.constant 0 : index
    %16 = vector.load %arg17[%c0_20, %c0_21] : memref<48x512xf32, #tpu.memory_space<vmem>>, vector<48x512xf32>
    tpu.vector_store %arg17[%c0_20, %c0_21], %15 {strides = array<i32>} : memref<48x512xf32, #tpu.memory_space<vmem>>, vector<48x512xf32>,
    %c0_22 = arith.constant 0 : index
    %c0_23 = arith.constant 0 : index
    %17 = vector.load %arg17[%c0_22, %c0_23] : memref<48x512xf32, #tpu.memory_space<vmem>>, vector<16x256xf32>
    %18 = arith.addf %6, %17 : vector<16x256xf32>
    %c16_24 = arith.constant 16 : index
    %c256 = arith.constant 256 : index
    %19 = vector.load %arg17[%c16_24, %c256] : memref<48x512xf32, #tpu.memory_space<vmem>>, vector<16x256xf32>
    %20 = arith.addf %18, %19 : vector<16x256xf32>
    %c0_25 = arith.constant 0 : index
    %c0_26 = arith.constant 0 : index
    %21 = vector.load %arg6[%c0_25, %c0_26] : memref<6x256xf32, #tpu.memory_space<vmem>>, vector<1x256xf32>
    %22 = vector.broadcast %21 : vector<1x256xf32> to vector<16x256xf32>
    %23 = arith.addf %20, %22 : vector<16x256xf32>
    %cst_27 = arith.constant 0.000000e+00 : f32
    %24 = vector.broadcast %cst_27 : f32 to vector<16x256xf32>
    %25 = arith.maximumf %23, %24 : vector<16x256xf32>
    %c0_28 = arith.constant 0 : index
    %c0_29 = arith.constant 0 : index
    %26 = vector.load %arg18[%c0_28, %c0_29] : memref<96x256xf32, #tpu.memory_space<vmem>>, vector<16x256xf32>
    tpu.vector_store %arg18[%c0_28, %c0_29], %25 {strides = array<i32>} : memref<96x256xf32, #tpu.memory_space<vmem>>, vector<16x256xf32>,
    %c0_30 = arith.constant 0 : index
    %c0_31 = arith.constant 0 : index
    %27 = vector.load %arg17[%c0_30, %c0_31] : memref<48x512xf32, #tpu.memory_space<vmem>>, vector<16x256xf32>
    %28 = arith.addf %6, %27 : vector<16x256xf32>
    %c32_32 = arith.constant 32 : index
    %c256_33 = arith.constant 256 : index
    %29 = vector.load %arg17[%c32_32, %c256_33] : memref<48x512xf32, #tpu.memory_space<vmem>>, vector<16x256xf32>
    %30 = arith.addf %28, %29 : vector<16x256xf32>
    %c1 = arith.constant 1 : index
    %c0_34 = arith.constant 0 : index
    %31 = vector.load %arg6[%c1, %c0_34] : memref<6x256xf32, #tpu.memory_space<vmem>>, vector<1x256xf32>
    %32 = vector.broadcast %31 : vector<1x256xf32> to vector<16x256xf32>
    %33 = arith.addf %30, %32 : vector<16x256xf32>
    %cst_35 = arith.constant 0.000000e+00 : f32
    %34 = vector.broadcast %cst_35 : f32 to vector<16x256xf32>
    %35 = arith.maximumf %33, %34 : vector<16x256xf32>
    %c16_36 = arith.constant 16 : index
    %c0_37 = arith.constant 0 : index
    %36 = vector.load %arg18[%c16_36, %c0_37] : memref<96x256xf32, #tpu.memory_space<vmem>>, vector<16x256xf32>
    tpu.vector_store %arg18[%c16_36, %c0_37], %35 {strides = array<i32>} : memref<96x256xf32, #tpu.memory_space<vmem>>, vector<16x256xf32>,
    %c16_38 = arith.constant 16 : index
    %c0_39 = arith.constant 0 : index
    %37 = vector.load %arg17[%c16_38, %c0_39] : memref<48x512xf32, #tpu.memory_space<vmem>>, vector<16x256xf32>
    %38 = arith.addf %6, %37 : vector<16x256xf32>
    %c0_40 = arith.constant 0 : index
    %c256_41 = arith.constant 256 : index
    %39 = vector.load %arg17[%c0_40, %c256_41] : memref<48x512xf32, #tpu.memory_space<vmem>>, vector<16x256xf32>
    %40 = arith.addf %38, %39 : vector<16x256xf32>
    %c2 = arith.constant 2 : index
    %c0_42 = arith.constant 0 : index
    %41 = vector.load %arg6[%c2, %c0_42] : memref<6x256xf32, #tpu.memory_space<vmem>>, vector<1x256xf32>
    %42 = vector.broadcast %41 : vector<1x256xf32> to vector<16x256xf32>
    %43 = arith.addf %40, %42 : vector<16x256xf32>
    %cst_43 = arith.constant 0.000000e+00 : f32
    %44 = vector.broadcast %cst_43 : f32 to vector<16x256xf32>
    %45 = arith.maximumf %43, %44 : vector<16x256xf32>
    %c32_44 = arith.constant 32 : index
    %c0_45 = arith.constant 0 : index
    %46 = vector.load %arg18[%c32_44, %c0_45] : memref<96x256xf32, #tpu.memory_space<vmem>>, vector<16x256xf32>
    tpu.vector_store %arg18[%c32_44, %c0_45], %45 {strides = array<i32>} : memref<96x256xf32, #tpu.memory_space<vmem>>, vector<16x256xf32>,
    %c16_46 = arith.constant 16 : index
    %c0_47 = arith.constant 0 : index
    %47 = vector.load %arg17[%c16_46, %c0_47] : memref<48x512xf32, #tpu.memory_space<vmem>>, vector<16x256xf32>
    %48 = arith.addf %6, %47 : vector<16x256xf32>
    %c32_48 = arith.constant 32 : index
    %c256_49 = arith.constant 256 : index
    %49 = vector.load %arg17[%c32_48, %c256_49] : memref<48x512xf32, #tpu.memory_space<vmem>>, vector<16x256xf32>
    %50 = arith.addf %48, %49 : vector<16x256xf32>
    %c3 = arith.constant 3 : index
    %c0_50 = arith.constant 0 : index
    %51 = vector.load %arg6[%c3, %c0_50] : memref<6x256xf32, #tpu.memory_space<vmem>>, vector<1x256xf32>
    %52 = vector.broadcast %51 : vector<1x256xf32> to vector<16x256xf32>
    %53 = arith.addf %50, %52 : vector<16x256xf32>
    %cst_51 = arith.constant 0.000000e+00 : f32
    %54 = vector.broadcast %cst_51 : f32 to vector<16x256xf32>
    %55 = arith.maximumf %53, %54 : vector<16x256xf32>
    %c48 = arith.constant 48 : index
    %c0_52 = arith.constant 0 : index
    %56 = vector.load %arg18[%c48, %c0_52] : memref<96x256xf32, #tpu.memory_space<vmem>>, vector<16x256xf32>
    tpu.vector_store %arg18[%c48, %c0_52], %55 {strides = array<i32>} : memref<96x256xf32, #tpu.memory_space<vmem>>, vector<16x256xf32>,
    %c32_53 = arith.constant 32 : index
    %c0_54 = arith.constant 0 : index
    %57 = vector.load %arg17[%c32_53, %c0_54] : memref<48x512xf32, #tpu.memory_space<vmem>>, vector<16x256xf32>
    %58 = arith.addf %6, %57 : vector<16x256xf32>
    %c0_55 = arith.constant 0 : index
    %c256_56 = arith.constant 256 : index
    %59 = vector.load %arg17[%c0_55, %c256_56] : memref<48x512xf32, #tpu.memory_space<vmem>>, vector<16x256xf32>
    %60 = arith.addf %58, %59 : vector<16x256xf32>
    %c4 = arith.constant 4 : index
    %c0_57 = arith.constant 0 : index
    %61 = vector.load %arg6[%c4, %c0_57] : memref<6x256xf32, #tpu.memory_space<vmem>>, vector<1x256xf32>
    %62 = vector.broadcast %61 : vector<1x256xf32> to vector<16x256xf32>
    %63 = arith.addf %60, %62 : vector<16x256xf32>
    %cst_58 = arith.constant 0.000000e+00 : f32
    %64 = vector.broadcast %cst_58 : f32 to vector<16x256xf32>
    %65 = arith.maximumf %63, %64 : vector<16x256xf32>
    %c64 = arith.constant 64 : index
    %c0_59 = arith.constant 0 : index
    %66 = vector.load %arg18[%c64, %c0_59] : memref<96x256xf32, #tpu.memory_space<vmem>>, vector<16x256xf32>
    tpu.vector_store %arg18[%c64, %c0_59], %65 {strides = array<i32>} : memref<96x256xf32, #tpu.memory_space<vmem>>, vector<16x256xf32>,
    %c32_60 = arith.constant 32 : index
    %c0_61 = arith.constant 0 : index
    %67 = vector.load %arg17[%c32_60, %c0_61] : memref<48x512xf32, #tpu.memory_space<vmem>>, vector<16x256xf32>
    %68 = arith.addf %6, %67 : vector<16x256xf32>
    %c16_62 = arith.constant 16 : index
    %c256_63 = arith.constant 256 : index
    %69 = vector.load %arg17[%c16_62, %c256_63] : memref<48x512xf32, #tpu.memory_space<vmem>>, vector<16x256xf32>
    %70 = arith.addf %68, %69 : vector<16x256xf32>
    %c5 = arith.constant 5 : index
    %c0_64 = arith.constant 0 : index
    %71 = vector.load %arg6[%c5, %c0_64] : memref<6x256xf32, #tpu.memory_space<vmem>>, vector<1x256xf32>
    %72 = vector.broadcast %71 : vector<1x256xf32> to vector<16x256xf32>
    %73 = arith.addf %70, %72 : vector<16x256xf32>
    %cst_65 = arith.constant 0.000000e+00 : f32
    %74 = vector.broadcast %cst_65 : f32 to vector<16x256xf32>
    %75 = arith.maximumf %73, %74 : vector<16x256xf32>
    %c80 = arith.constant 80 : index
    %c0_66 = arith.constant 0 : index
    %76 = vector.load %arg18[%c80, %c0_66] : memref<96x256xf32, #tpu.memory_space<vmem>>, vector<16x256xf32>
    tpu.vector_store %arg18[%c80, %c0_66], %75 {strides = array<i32>} : memref<96x256xf32, #tpu.memory_space<vmem>>, vector<16x256xf32>,
    %c0_67 = arith.constant 0 : index
    %c0_68 = arith.constant 0 : index
    %77 = vector.load %arg18[%c0_67, %c0_68] : memref<96x256xf32, #tpu.memory_space<vmem>>, vector<96x256xf32>
    %c0_69 = arith.constant 0 : index
    %c0_70 = arith.constant 0 : index
    %78 = vector.load %arg7[%c0_69, %c0_70] : memref<256x64xf32, #tpu.memory_space<vmem>>, vector<256x64xf32>
    %cst_71 = arith.constant dense<0.000000e+00> : vector<96x64xf32>
    %79 = tpu.matmul %77, %78, %cst_71 {dimension_numbers = #tpu.dot_dimension_numbers<[1], [0], [0], [1], [0, 0, 1, 1], [], []>} : vector<96x256xf32>, vector<256x64xf32>, vector<96x64xf32> -> vector<96x64xf32>
    %c0_72 = arith.constant 0 : index
    %c0_73 = arith.constant 0 : index
    %80 = vector.load %arg8[%c0_72, %c0_73] : memref<1x64xf32, #tpu.memory_space<vmem>>, vector<1x64xf32>
    %81 = vector.broadcast %80 : vector<1x64xf32> to vector<96x64xf32>
    %82 = arith.addf %79, %81 : vector<96x64xf32>
    %cst_74 = arith.constant 0.000000e+00 : f32
    %83 = vector.broadcast %cst_74 : f32 to vector<96x64xf32>
    %84 = arith.maximumf %82, %83 : vector<96x64xf32>
    %85 = vector.extract_strided_slice %84 {offsets = [0, 0], sizes = [16, 64], strides = [1, 1]} : vector<96x64xf32> to vector<16x64xf32>
    %86 = vector.extract_strided_slice %84 {offsets = [16, 0], sizes = [16, 64], strides = [1, 1]} : vector<96x64xf32> to vector<16x64xf32>
    %87 = arith.addf %85, %86 : vector<16x64xf32>
    %88 = vector.extract_strided_slice %84 {offsets = [32, 0], sizes = [16, 64], strides = [1, 1]} : vector<96x64xf32> to vector<16x64xf32>
    %89 = arith.addf %87, %88 : vector<16x64xf32>
    %90 = vector.extract_strided_slice %84 {offsets = [48, 0], sizes = [16, 64], strides = [1, 1]} : vector<96x64xf32> to vector<16x64xf32>
    %91 = arith.addf %89, %90 : vector<16x64xf32>
    %92 = vector.extract_strided_slice %84 {offsets = [64, 0], sizes = [16, 64], strides = [1, 1]} : vector<96x64xf32> to vector<16x64xf32>
    %93 = arith.addf %91, %92 : vector<16x64xf32>
    %94 = vector.extract_strided_slice %84 {offsets = [80, 0], sizes = [16, 64], strides = [1, 1]} : vector<96x64xf32> to vector<16x64xf32>
    %95 = arith.addf %93, %94 : vector<16x64xf32>
    %c0_75 = arith.constant 0 : index
    %c0_76 = arith.constant 0 : index
    %96 = vector.load %arg9[%c0_75, %c0_76] : memref<64x256xf32, #tpu.memory_space<vmem>>, vector<64x256xf32>
    %cst_77 = arith.constant dense<0.000000e+00> : vector<16x256xf32>
    %97 = tpu.matmul %95, %96, %cst_77 {dimension_numbers = #tpu.dot_dimension_numbers<[1], [0], [0], [1], [0, 0, 1, 1], [], []>} : vector<16x64xf32>, vector<64x256xf32>, vector<16x256xf32> -> vector<16x256xf32>
    %c0_78 = arith.constant 0 : index
    %c0_79 = arith.constant 0 : index
    %98 = vector.load %arg10[%c0_78, %c0_79] : memref<1x256xf32, #tpu.memory_space<vmem>>, vector<1x256xf32>
    %99 = vector.broadcast %98 : vector<1x256xf32> to vector<16x256xf32>
    %100 = arith.addf %97, %99 : vector<16x256xf32>
    %cst_80 = arith.constant 0.000000e+00 : f32
    %101 = vector.broadcast %cst_80 : f32 to vector<16x256xf32>
    %102 = arith.maximumf %100, %101 : vector<16x256xf32>
    %c0_81 = arith.constant 0 : index
    %c0_82 = arith.constant 0 : index
    %103 = vector.load %arg11[%c0_81, %c0_82] : memref<256x256xf32, #tpu.memory_space<vmem>>, vector<256x256xf32>
    %cst_83 = arith.constant dense<0.000000e+00> : vector<16x256xf32>
    %104 = tpu.matmul %102, %103, %cst_83 {dimension_numbers = #tpu.dot_dimension_numbers<[1], [0], [0], [1], [0, 0, 1, 1], [], []>} : vector<16x256xf32>, vector<256x256xf32>, vector<16x256xf32> -> vector<16x256xf32>
    %c0_84 = arith.constant 0 : index
    %c0_85 = arith.constant 0 : index
    %105 = vector.load %arg12[%c0_84, %c0_85] : memref<1x256xf32, #tpu.memory_space<vmem>>, vector<1x256xf32>
    %106 = vector.broadcast %105 : vector<1x256xf32> to vector<16x256xf32>
    %107 = arith.addf %104, %106 : vector<16x256xf32>
    %cst_86 = arith.constant 0.000000e+00 : f32
    %108 = vector.broadcast %cst_86 : f32 to vector<16x256xf32>
    %109 = arith.maximumf %107, %108 : vector<16x256xf32>
    %c0_87 = arith.constant 0 : index
    %c0_88 = arith.constant 0 : index
    %110 = vector.load %arg13[%c0_87, %c0_88] : memref<256x128xf32, #tpu.memory_space<vmem>>, vector<256x128xf32>
    %cst_89 = arith.constant dense<0.000000e+00> : vector<16x128xf32>
    %111 = tpu.matmul %109, %110, %cst_89 {dimension_numbers = #tpu.dot_dimension_numbers<[1], [0], [0], [1], [0, 0, 1, 1], [], []>} : vector<16x256xf32>, vector<256x128xf32>, vector<16x128xf32> -> vector<16x128xf32>
    %c0_90 = arith.constant 0 : index
    %c0_91 = arith.constant 0 : index
    %112 = vector.load %arg14[%c0_90, %c0_91] : memref<1x128xf32, #tpu.memory_space<vmem>>, vector<1x128xf32>
    %113 = vector.broadcast %112 : vector<1x128xf32> to vector<16x128xf32>
    %114 = arith.addf %111, %113 : vector<16x128xf32>
    %115 = tpu.iota {dimensions = array<i32: 1>} : vector<16x128xi32>
    %cst_92 = arith.constant -2.000000e+01 : f32
    %cst_93 = arith.constant 2.000000e+00 : f32
    %116 = vector.broadcast %cst_92 : f32 to vector<16x128xf32>
    %117 = arith.maximumf %116, %114 : vector<16x128xf32>
    %118 = vector.broadcast %cst_93 : f32 to vector<16x128xf32>
    %119 = arith.minimumf %118, %117 : vector<16x128xf32>
    %c4_i32 = arith.constant 4 : i32
    %120 = vector.broadcast %c4_i32 : i32 to vector<16x128xi32>
    %121 = arith.cmpi sge, %115, %120 : vector<16x128xi32>
    %122 = arith.select %121, %119, %114 : vector<16x128xi1>, vector<16x128xf32>
    %c0_94 = arith.constant 0 : index
    %c0_95 = arith.constant 0 : index
    %123 = vector.load %arg15[%c0_94, %c0_95] : memref<16x128xf32, #tpu.memory_space<vmem>>, vector<16x128xf32>
    tpu.vector_store %arg15[%c0_94, %c0_95], %122 {strides = array<i32>} : memref<16x128xf32, #tpu.memory_space<vmem>>, vector<16x128xf32>,
    return
  }
  func.func @transform_0(%arg0: i32) -> (i32, i32) {
    %c0_i32 = arith.constant 0 : i32
    %c0_i32_0 = arith.constant 0 : i32
    return %arg0, %c0_i32 : i32, i32
  }
  func.func @transform_1(%arg0: i32) -> (i32, i32) {
    %c0_i32 = arith.constant 0 : i32
    %c0_i32_0 = arith.constant 0 : i32
    return %arg0, %c0_i32 : i32, i32
  }
  func.func @transform_2(%arg0: i32) -> (i32, i32) {
    %c0_i32 = arith.constant 0 : i32
    %c0_i32_0 = arith.constant 0 : i32
    %c0_i32_1 = arith.constant 0 : i32
    return %c0_i32, %c0_i32_0 : i32, i32
  }
  func.func @transform_3(%arg0: i32) -> (i32, i32) {
    %c0_i32 = arith.constant 0 : i32
    %c0_i32_0 = arith.constant 0 : i32
    %c0_i32_1 = arith.constant 0 : i32
    return %c0_i32, %c0_i32_0 : i32, i32
  }
  func.func @transform_4(%arg0: i32) -> (i32, i32) {
    %c0_i32 = arith.constant 0 : i32
    %c0_i32_0 = arith.constant 0 : i32
    %c0_i32_1 = arith.constant 0 : i32
    return %c0_i32, %c0_i32_0 : i32, i32
  }
  func.func @transform_5(%arg0: i32) -> (i32, i32) {
    %c0_i32 = arith.constant 0 : i32
    %c0_i32_0 = arith.constant 0 : i32
    %c0_i32_1 = arith.constant 0 : i32
    return %c0_i32, %c0_i32_0 : i32, i32
  }
  func.func @transform_6(%arg0: i32) -> (i32, i32) {
    %c0_i32 = arith.constant 0 : i32
    %c0_i32_0 = arith.constant 0 : i32
    %c0_i32_1 = arith.constant 0 : i32
    return %c0_i32, %c0_i32_0 : i32, i32
  }
  func.func @transform_7(%arg0: i32) -> (i32, i32) {
    %c0_i32 = arith.constant 0 : i32
    %c0_i32_0 = arith.constant 0 : i32
    %c0_i32_1 = arith.constant 0 : i32
    return %c0_i32, %c0_i32_0 : i32, i32
  }
  func.func @transform_8(%arg0: i32) -> (i32, i32) {
    %c0_i32 = arith.constant 0 : i32
    %c0_i32_0 = arith.constant 0 : i32
    %c0_i32_1 = arith.constant 0 : i32
    return %c0_i32, %c0_i32_0 : i32, i32
  }
  func.func @transform_9(%arg0: i32) -> (i32, i32) {
    %c0_i32 = arith.constant 0 : i32
    %c0_i32_0 = arith.constant 0 : i32
    %c0_i32_1 = arith.constant 0 : i32
    return %c0_i32, %c0_i32_0 : i32, i32
  }
  func.func @transform_10(%arg0: i32) -> (i32, i32) {
    %c0_i32 = arith.constant 0 : i32
    %c0_i32_0 = arith.constant 0 : i32
    %c0_i32_1 = arith.constant 0 : i32
    return %c0_i32, %c0_i32_0 : i32, i32
  }
  func.func @transform_11(%arg0: i32) -> (i32, i32) {
    %c0_i32 = arith.constant 0 : i32
    %c0_i32_0 = arith.constant 0 : i32
    %c0_i32_1 = arith.constant 0 : i32
    return %c0_i32, %c0_i32_0 : i32, i32
  }
  func.func @transform_12(%arg0: i32) -> (i32, i32) {
    %c0_i32 = arith.constant 0 : i32
    %c0_i32_0 = arith.constant 0 : i32
    %c0_i32_1 = arith.constant 0 : i32
    return %c0_i32, %c0_i32_0 : i32, i32
  }
  func.func @transform_13(%arg0: i32) -> (i32, i32) {
    %c0_i32 = arith.constant 0 : i32
    %c0_i32_0 = arith.constant 0 : i32
    %c0_i32_1 = arith.constant 0 : i32
    return %c0_i32, %c0_i32_0 : i32, i32
  }
  func.func @transform_14(%arg0: i32) -> (i32, i32) {
    %c0_i32 = arith.constant 0 : i32
    %c0_i32_0 = arith.constant 0 : i32
    return %arg0, %c0_i32 : i32, i32
  }
}

</mosaic_0001>

<llo_original>
// kernel: tpu_custom_call.1
$region0: #{tpu_custom_call.1}
  #allocation0 [shape = 'u32[]', space=smem, size = 0x4, offset = 0x4, fixed_abs, tag = 'smem constant byte address 0x4 - core index']
  #allocation1 [shape = 'u32[144,128]{1,0:T(1,128)}', space=vmem, size = 0x12000, scoped, tag = 'internal scratch']
  #allocation2 [shape = 'f32[48,15]{1,0:T(8,128)}', space=vmem, size = 0x6000, scoped, tag = 'scratch operand']
  #allocation3 [shape = 'f32[48,512]{1,0:T(8,128)}', space=vmem, size = 0x18000, scoped, tag = 'scratch operand']
  #allocation4 [shape = 'f32[96,256]{1,0:T(8,128)}', space=vmem, size = 0x18000, scoped, tag = 'scratch operand']
  %s0 = inlined_call_operand.hbm [shape: f32[16,55], index: 0, kind: input, shape index: {}]
  %s1 = inlined_call_operand.vmem [shape: f32[16,8], index: 1, kind: input, shape index: {}]
  %s2 = inlined_call_operand.hbm [shape: f32[8,256], index: 2, kind: input, shape index: {}]
  %s3 = inlined_call_operand.hbm [shape: f32[10,256], index: 3, kind: input, shape index: {}]
  %s4 = inlined_call_operand.vmem [shape: f32[15,512], index: 4, kind: input, shape index: {}]
  %s5 = inlined_call_operand.hbm [shape: f32[6,256], index: 5, kind: input, shape index: {}]
  %s6 = inlined_call_operand.vmem [shape: f32[256,64], index: 6, kind: input, shape index: {}]
  %s7 = inlined_call_operand.vmem [shape: f32[1,64], index: 7, kind: input, shape index: {}]
  %s8 = inlined_call_operand.vmem [shape: f32[64,256], index: 8, kind: input, shape index: {}]
  %s9 = inlined_call_operand.vmem [shape: f32[1,256], index: 9, kind: input, shape index: {}]
  %s10 = inlined_call_operand.hbm [shape: f32[256,256], index: 10, kind: input, shape index: {}]
  %s11 = inlined_call_operand.vmem [shape: f32[1,256], index: 11, kind: input, shape index: {}]
  %s12 = inlined_call_operand.vmem [shape: f32[256,128], index: 12, kind: input, shape index: {}]
  %s13 = inlined_call_operand.hbm [shape: f32[1,128], index: 13, kind: input, shape index: {}]
  %s14 = inlined_call_operand.hbm [shape: f32[16,128], index: 14, kind: output, shape index: {}]
  %s15 = sld [smem:[#allocation0]]
  $region90: #{tpu_custom_call.1} parent=0
    _
  %s17 = ssub.s32 1, %s15
  %s18 = scalar_select 0, %s17, %s15
  $region1: #{tpu_custom_call.1} parent=0
    #allocation5 [shape = 'u8[8192]{0}', space=vmem, size = 0x2000, scoped, tag = 'input window, operand 0, single buffered']
    #allocation6 [shape = 's32[1]{0}', space=sflag, size = 0x4, scoped, tag = 'scoped memory for tpu_custom_call.1']
    #allocation7 [shape = 's32[1]{0}', space=sflag, size = 0x4, scoped, tag = 'scoped memory for tpu_custom_call.1']
    #allocation8 [shape = 'u8[8192]{0}', space=vmem, size = 0x2000, scoped, tag = 'input window, operand 2, single buffered']
    #allocation9 [shape = 's32[1]{0}', space=sflag, size = 0x4, scoped, tag = 'scoped memory for tpu_custom_call.1']
    #allocation10 [shape = 'u8[16384]{0}', space=vmem, size = 0x4000, scoped, tag = 'input window, operand 3, single buffered']
    #allocation11 [shape = 'u8[8192]{0}', space=vmem, size = 0x2000, scoped, tag = 'input window, operand 5, single buffered']
    #allocation12 [shape = 's32[1]{0}', space=sflag, size = 0x4, scoped, tag = 'scoped memory for tpu_custom_call.1']
    #allocation13 [shape = 'u8[262144]{0}', space=vmem, size = 0x40000, scoped, tag = 'input window, operand 10, single buffered']
    #allocation14 [shape = 'u8[512]{0}', space=vmem, size = 0x400, scoped, tag = 'input window, operand 13, single buffered']
    #allocation15 [shape = 's32[1]{0}', space=sflag, size = 0x4, scoped, tag = 'scoped memory for tpu_custom_call.1']
    #allocation16 [shape = 'u8[8192]{0}', space=vmem, size = 0x2000, scoped, tag = 'output window, operand 0, single buffered']
    %19 = vsyncpa [#allocation6], 0
    %20 = vsyncpa [#allocation9], 0
    %21 = vsyncpa [#allocation12], 0
    %22 = vsyncpa [#allocation15], 0
    %23 = vsyncpa [#allocation7], 0
    // Predicated region
    $region2: #{tpu_custom_call.1} parent=1 // pred_check
      _
    $region3: #{tpu_custom_call.1} parent=1 // pred_check_branch
      %25 = sbr.rel (0) target = $region5
    $region4: #{tpu_custom_call.1} parent=1 // pred_region
      %s27 = ssub.s32 256, 256
      %28 = vsyncadd [#allocation6], %s27
      %s29 = sshll.u32 [#allocation5], 4
      %s30 = int_to_ptr.vmem [resolvable:$true] %s29
      %35 = dma.hbm_to_vmem [thread:$0]  %s0, 256, %s30, [#allocation6], 128, 128, 8
    $region5: #{tpu_custom_call.1} parent=1 // pred_fallthru
      _
    // Predicated region
    $region6: #{tpu_custom_call.1} parent=1 // pred_check
      _
    $region7: #{tpu_custom_call.1} parent=1 // pred_check_branch
      %37 = sbr.rel (0) target = $region9
    $region8: #{tpu_custom_call.1} parent=1 // pred_region
      _
    $region9: #{tpu_custom_call.1} parent=1 // pred_fallthru
      _
    // Predicated region
    $region10: #{tpu_custom_call.1} parent=1 // pred_check
      _
    $region11: #{tpu_custom_call.1} parent=1 // pred_check_branch
      %39 = sbr.rel (0) target = $region13
    $region12: #{tpu_custom_call.1} parent=1 // pred_region
      %s41 = ssub.s32 256, 256
      %42 = vsyncadd [#allocation9], %s41
      %s44 = sshll.u32 [#allocation8], 4
      %s45 = int_to_ptr.vmem [resolvable:$true] %s44
      %47 = dma.hbm_to_vmem [thread:$0]  %s2, 256, %s45, [#allocation9]
    $region13: #{tpu_custom_call.1} parent=1 // pred_fallthru
      _
    // Predicated region
    $region14: #{tpu_custom_call.1} parent=1 // pred_check
      _
    $region15: #{tpu_custom_call.1} parent=1 // pred_check_branch
      %49 = sbr.rel (0) target = $region17
    $region16: #{tpu_custom_call.1} parent=1 // pred_region
      %s51 = ssub.s32 512, 512
      %52 = vsyncadd [#allocation9], %s51
      %s53 = sshll.u32 [#allocation10], 4
      %s54 = int_to_ptr.vmem [resolvable:$true] %s53
      %59 = dma.hbm_to_vmem [thread:$0]  %s3, 512, %s54, [#allocation9], 256, 256, 16
    $region17: #{tpu_custom_call.1} parent=1 // pred_fallthru
      _
    // Predicated region
    $region18: #{tpu_custom_call.1} parent=1 // pred_check
      _
    $region19: #{tpu_custom_call.1} parent=1 // pred_check_branch
      %61 = sbr.rel (0) target = $region21
    $region20: #{tpu_custom_call.1} parent=1 // pred_region
      _
    $region21: #{tpu_custom_call.1} parent=1 // pred_fallthru
      _
    // Predicated region
    $region22: #{tpu_custom_call.1} parent=1 // pred_check
      _
    $region23: #{tpu_custom_call.1} parent=1 // pred_check_branch
      %63 = sbr.rel (0) target = $region25
    $region24: #{tpu_custom_call.1} parent=1 // pred_region
      %s65 = ssub.s32 256, 256
      %66 = vsyncadd [#allocation12], %s65
      %s68 = sshll.u32 [#allocation11], 4
      %s69 = int_to_ptr.vmem [resolvable:$true] %s68
      %71 = dma.hbm_to_vmem [thread:$0]  %s5, 256, %s69, [#allocation12]
    $region25: #{tpu_custom_call.1} parent=1 // pred_fallthru
      _
    // Predicated region
    $region26: #{tpu_custom_call.1} parent=1 // pred_check
      _
    $region27: #{tpu_custom_call.1} parent=1 // pred_check_branch
      %73 = sbr.rel (0) target = $region29
    $region28: #{tpu_custom_call.1} parent=1 // pred_region
      _
    $region29: #{tpu_custom_call.1} parent=1 // pred_fallthru
      _
    // Predicated region
    $region30: #{tpu_custom_call.1} parent=1 // pred_check
      _
    $region31: #{tpu_custom_call.1} parent=1 // pred_check_branch
      %75 = sbr.rel (0) target = $region33
    $region32: #{tpu_custom_call.1} parent=1 // pred_region
      _
    $region33: #{tpu_custom_call.1} parent=1 // pred_fallthru
      _
    // Predicated region
    $region34: #{tpu_custom_call.1} parent=1 // pred_check
      _
    $region35: #{tpu_custom_call.1} parent=1 // pred_check_branch
      %77 = sbr.rel (0) target = $region37
    $region36: #{tpu_custom_call.1} parent=1 // pred_region
      _
    $region37: #{tpu_custom_call.1} parent=1 // pred_fallthru
      _
    // Predicated region
    $region38: #{tpu_custom_call.1} parent=1 // pred_check
      _
    $region39: #{tpu_custom_call.1} parent=1 // pred_check_branch
      %79 = sbr.rel (0) target = $region41
    $region40: #{tpu_custom_call.1} parent=1 // pred_region
      _
    $region41: #{tpu_custom_call.1} parent=1 // pred_fallthru
      _
    // Predicated region
    $region42: #{tpu_custom_call.1} parent=1 // pred_check
      _
    $region43: #{tpu_custom_call.1} parent=1 // pred_check_branch
      %81 = sbr.rel (0) target = $region45
    $region44: #{tpu_custom_call.1} parent=1 // pred_region
      %s83 = ssub.s32 8192, 8192
      %84 = vsyncadd [#allocation12], %s83
      %s85 = sshll.u32 [#allocation13], 4
      %s86 = int_to_ptr.vmem [resolvable:$true] %s85
      %91 = dma.hbm_to_vmem [thread:$0]  %s10, 8192, %s86, [#allocation12], 256, 256, 16
    $region45: #{tpu_custom_call.1} parent=1 // pred_fallthru
      _
    // Predicated region
    $region46: #{tpu_custom_call.1} parent=1 // pred_check
      _
    $region47: #{tpu_custom_call.1} parent=1 // pred_check_branch
      %93 = sbr.rel (0) target = $region49
    $region48: #{tpu_custom_call.1} parent=1 // pred_region
      _
    $region49: #{tpu_custom_call.1} parent=1 // pred_fallthru
      _
    // Predicated region
    $region50: #{tpu_custom_call.1} parent=1 // pred_check
      _
    $region51: #{tpu_custom_call.1} parent=1 // pred_check_branch
      %95 = sbr.rel (0) target = $region53
    $region52: #{tpu_custom_call.1} parent=1 // pred_region
      _
    $region53: #{tpu_custom_call.1} parent=1 // pred_fallthru
      _
    // Predicated region
    $region54: #{tpu_custom_call.1} parent=1 // pred_check
      _
    $region55: #{tpu_custom_call.1} parent=1 // pred_check_branch
      %97 = sbr.rel (0) target = $region57
    $region56: #{tpu_custom_call.1} parent=1 // pred_region
      %s99 = ssub.s32 16, 16
      %100 = vsyncadd [#allocation15], %s99
      %s102 = sshll.u32 [#allocation14], 4
      %s103 = int_to_ptr.vmem [resolvable:$true] %s102
      %105 = dma.hbm_to_vmem [thread:$0]  %s13, 16, %s103, [#allocation15]
    $region57: #{tpu_custom_call.1} parent=1 // pred_fallthru
      _
    // Predicated region
    $region58: #{tpu_custom_call.1} parent=1 // pred_check
      _
    $region59: #{tpu_custom_call.1} parent=1 // pred_check_branch
      %107 = sbr.rel (0) target = $region61
    $region60: #{tpu_custom_call.1} parent=1 // pred_region
      %108 = dma.done [#allocation6], 256
    $region61: #{tpu_custom_call.1} parent=1 // pred_fallthru
      _
    // Predicated region
    $region62: #{tpu_custom_call.1} parent=1 // pred_check
      _
    $region63: #{tpu_custom_call.1} parent=1 // pred_check_branch
      %110 = sbr.rel (0) target = $region65
    $region64: #{tpu_custom_call.1} parent=1 // pred_region
      %111 = dma.done [#allocation9], 256
    $region65: #{tpu_custom_call.1} parent=1 // pred_fallthru
      _
    // Predicated region
    $region66: #{tpu_custom_call.1} parent=1 // pred_check
      _
    $region67: #{tpu_custom_call.1} parent=1 // pred_check_branch
      %113 = sbr.rel (0) target = $region69
    $region68: #{tpu_custom_call.1} parent=1 // pred_region
      %114 = dma.done [#allocation9], 512
    $region69: #{tpu_custom_call.1} parent=1 // pred_fallthru
      _
    // Predicated region
    $region70: #{tpu_custom_call.1} parent=1 // pred_check
      _
    $region71: #{tpu_custom_call.1} parent=1 // pred_check_branch
      %116 = sbr.rel (0) target = $region73
    $region72: #{tpu_custom_call.1} parent=1 // pred_region
      %117 = dma.done [#allocation12], 256
    $region73: #{tpu_custom_call.1} parent=1 // pred_fallthru
      _
    // Predicated region
    $region74: #{tpu_custom_call.1} parent=1 // pred_check
      _
    $region75: #{tpu_custom_call.1} parent=1 // pred_check_branch
      %119 = sbr.rel (0) target = $region77
    $region76: #{tpu_custom_call.1} parent=1 // pred_region
      %120 = dma.done [#allocation12], 8192
    $region77: #{tpu_custom_call.1} parent=1 // pred_fallthru
      _
    // Predicated region
    $region78: #{tpu_custom_call.1} parent=1 // pred_check
      _
    $region79: #{tpu_custom_call.1} parent=1 // pred_check_branch
      %122 = sbr.rel (0) target = $region81
    $region80: #{tpu_custom_call.1} parent=1 // pred_region
      %123 = dma.done [#allocation15], 16
    $region81: #{tpu_custom_call.1} parent=1 // pred_fallthru
      _
    %v124 = vld [vmem:[%s1] sm:$0xff]
    %v125 = vld [vmem:[%s1 + $0x8] sm:$0xff]
    %v126 = vld [vmem:[#allocation8] sm:$0xff]
    %v127 = vld [vmem:[#allocation8 + $0x8] sm:$0xff]
    %v128 = vld [vmem:[#allocation5] sm:$0xff]
    %v129 = vld [vmem:[#allocation5 + $0x8] sm:$0xff]
    %v130 = vld [vmem:[#allocation10] sm:$0xff]
    %v131 = vld [vmem:[#allocation10 + $0x8] sm:$0xff]
    %v132 = vld [vmem:[#allocation10 + $0x10] sm:$0x3]
    %v133 = vld [vmem:[#allocation10 + $0x18] sm:$0x3]
    %vm134 = vcmask 80896
    %v136 = vsel %vm134, %v128, 0
    %v139 = vsel %vm134, %v129, 0
    %vm141 = vcmask 1041408
    %v143 = vsel %vm141, %v132, 0
    %v146 = vsel %vm141, %v133, 0
    %148 = vmatprep.subr.mxu0 %v131
    %149 = vmatpush1.msra.mxu0 %v130
    %150 = vmatprep.subr.mxu0 %v146
    %151 = vmatpush1.msra.mxu0 %v143
    %152 = vmatprep.subr.mxu0 0.0
    %153 = vmatpush1.msra.mxu0 0.0
    %154 = vmatprep.subr.mxu0 0.0
    %155 = vmatpush1.msra.mxu0 0.0
    %156 = vmatprep.subr.mxu0 0.0
    %157 = vmatpush1.msra.mxu0 0.0
    %158 = vmatprep.subr.mxu0 0.0
    %159 = vmatpush1.msra.mxu0 0.0
    %160 = vmatprep.subr.mxu0 0.0
    %161 = vmatpush1.msra.mxu0 0.0
    %162 = vmatprep.subr.mxu0 0.0
    %163 = vmatpush1.msra.mxu0 0.0
    %164 = vmatprep.subr.mxu0 0.0
    %165 = vmatpush1.msra.mxu0 0.0
    %166 = vmatprep.subr.mxu0 0.0
    %167 = vmatpush1.msra.mxu0 0.0
    %168 = vmatprep.subr.mxu0 0.0
    %169 = vmatpush1.msra.mxu0 0.0
    %170 = vmatprep.subr.mxu0 0.0
    %171 = vmatpush1.msra.mxu0 0.0
    %172 = vmatprep.subr.mxu0 0.0
    %173 = vmatpush1.msra.mxu0 0.0
    %174 = vmatprep.subr.mxu0 0.0
    %175 = vmatpush1.msra.mxu0 0.0
    %176 = vmatprep.subr.mxu0 0.0
    %177 = vmatpush1.msra.mxu0 0.0
    %178 = vmatprep.subr.mxu0 0.0
    %179 = vmatpush1.msra.mxu0 0.0
    %180 = vmatprep.subr.mxu0 0.0
    %181 = vmatpush1.msra.mxu0 0.0
    %182 = vmatprep.subr.mxu0 0.0
    %183 = vmatpush1.msra.mxu0 0.0
    %184 = vmatprep.subr.mxu0 0.0
    %185 = vmatpush1.msra.mxu0 0.0
    %186 = vmatprep.subr.mxu0 0.0
    %187 = vmatpush1.msra.mxu0 0.0
    %188 = vmatprep.subr.mxu0 0.0
    %189 = vmatpush1.msra.mxu0 0.0
    %190 = vmatprep.subr.mxu0 0.0
    %191 = vmatpush1.msra.mxu0 0.0
    %192 = vmatprep.subr.mxu0 0.0
    %193 = vmatpush1.msra.mxu0 0.0
    %194 = vmatprep.subr.mxu0 0.0
    %195 = vmatpush1.msra.mxu0 0.0
    %196 = vmatprep.subr.mxu0 0.0
    %197 = vmatpush1.msra.mxu0 0.0
    %198 = vmatprep.subr.mxu0 0.0
    %199 = vmatpush1.msra.mxu0 0.0
    %200 = vmatprep.subr.mxu0 0.0
    %201 = vmatpush1.msra.mxu0 0.0
    %202 = vmatprep.subr.mxu0 0.0
    %203 = vmatpush1.msra.mxu0 0.0
    %204 = vmatprep.subr.mxu0 0.0
    %205 = vmatpush1.msra.mxu0 0.0
    %206 = vmatprep.subr.mxu0 0.0
    %207 = vmatpush1.msra.mxu0 0.0
    %208 = vmatprep.subr.mxu0 0.0
    %209 = vmatpush1.msra.mxu0 0.0
    %210 = vmatprep.subr.mxu0 0.0
    %211 = vmatpush1.msra.mxu0 0.0
    %212 = vmatprep.mubr.f32.mxu0 0.0
    %213 = vmatmul.mubr.f32.gmra.mrb[0].mxu0 %v136
    %v214 = vpop.f32.mrb[0].mxu0
    %v215 = vadd.f32 0.0, %v214
    %v216 = vpop.f32.mrb[0].mxu0
    %v217 = vadd.f32 0.0, %v216
    %218 = vmatprep.mubr.f32.mxu0 0.0
    %219 = vmatmul.mubr.f32.gmra.mrb[0].mxu0 %v139
    %v220 = vpop.f32.mrb[0].mxu0
    %v221 = vadd.f32 0.0, %v220
    %v222 = vpop.f32.mrb[0].mxu0
    %v223 = vadd.f32 0.0, %v222
    %224 = vdwg.mxu0
    %vm225 = vcmask 64512
    %v227 = vsel %vm225, %v124, 0
    %v230 = vsel %vm225, %v125, 0
    %232 = vmatprep.subr.mxu0 %v127
    %233 = vmatpush1.msra.mxu0 %v126
    %234 = vmatprep.subr.mxu0 0.0
    %235 = vmatpush1.msra.mxu0 0.0
    %236 = vmatprep.subr.mxu0 0.0
    %237 = vmatpush1.msra.mxu0 0.0
    %238 = vmatprep.subr.mxu0 0.0
    %239 = vmatpush1.msra.mxu0 0.0
    %240 = vmatprep.subr.mxu0 0.0
    %241 = vmatpush1.msra.mxu0 0.0
    %242 = vmatprep.subr.mxu0 0.0
    %243 = vmatpush1.msra.mxu0 0.0
    %244 = vmatprep.subr.mxu0 0.0
    %245 = vmatpush1.msra.mxu0 0.0
    %246 = vmatprep.subr.mxu0 0.0
    %247 = vmatpush1.msra.mxu0 0.0
    %248 = vmatprep.subr.mxu0 0.0
    %249 = vmatpush1.msra.mxu0 0.0
    %250 = vmatprep.subr.mxu0 0.0
    %251 = vmatpush1.msra.mxu0 0.0
    %252 = vmatprep.subr.mxu0 0.0
    %253 = vmatpush1.msra.mxu0 0.0
    %254 = vmatprep.subr.mxu0 0.0
    %255 = vmatpush1.msra.mxu0 0.0
    %256 = vmatprep.subr.mxu0 0.0
    %257 = vmatpush1.msra.mxu0 0.0
    %258 = vmatprep.subr.mxu0 0.0
    %259 = vmatpush1.msra.mxu0 0.0
    %260 = vmatprep.subr.mxu0 0.0
    %261 = vmatpush1.msra.mxu0 0.0
    %262 = vmatprep.subr.mxu0 0.0
    %263 = vmatpush1.msra.mxu0 0.0
    %264 = vmatprep.subr.mxu0 0.0
    %265 = vmatpush1.msra.mxu0 0.0
    %266 = vmatprep.subr.mxu0 0.0
    %267 = vmatpush1.msra.mxu0 0.0
    %268 = vmatprep.subr.mxu0 0.0
    %269 = vmatpush1.msra.mxu0 0.0
    %270 = vmatprep.subr.mxu0 0.0
    %271 = vmatpush1.msra.mxu0 0.0
    %272 = vmatprep.subr.mxu0 0.0
    %273 = vmatpush1.msra.mxu0 0.0
    %274 = vmatprep.subr.mxu0 0.0
    %275 = vmatpush1.msra.mxu0 0.0
    %276 = vmatprep.subr.mxu0 0.0
    %277 = vmatpush1.msra.mxu0 0.0
    %278 = vmatprep.subr.mxu0 0.0
    %279 = vmatpush1.msra.mxu0 0.0
    %280 = vmatprep.subr.mxu0 0.0
    %281 = vmatpush1.msra.mxu0 0.0
    %282 = vmatprep.subr.mxu0 0.0
    %283 = vmatpush1.msra.mxu0 0.0
    %284 = vmatprep.subr.mxu0 0.0
    %285 = vmatpush1.msra.mxu0 0.0
    %286 = vmatprep.subr.mxu0 0.0
    %287 = vmatpush1.msra.mxu0 0.0
    %288 = vmatprep.subr.mxu0 0.0
    %289 = vmatpush1.msra.mxu0 0.0
    %290 = vmatprep.subr.mxu0 0.0
    %291 = vmatpush1.msra.mxu0 0.0
    %292 = vmatprep.subr.mxu0 0.0
    %293 = vmatpush1.msra.mxu0 0.0
    %294 = vmatprep.subr.mxu0 0.0
    %295 = vmatpush1.msra.mxu0 0.0
    %296 = vmatprep.mubr.f32.mxu0 0.0
    %297 = vmatmul.mubr.f32.gmra.mrb[0].mxu0 %v227
    %v298 = vpop.f32.mrb[0].mxu0
    %v299 = vadd.f32 %v215, %v298
    %v300 = vpop.f32.mrb[0].mxu0
    %v301 = vadd.f32 %v217, %v300
    %302 = vmatprep.mubr.f32.mxu0 0.0
    %303 = vmatmul.mubr.f32.gmra.mrb[0].mxu0 %v230
    %v304 = vpop.f32.mrb[0].mxu0
    %v305 = vadd.f32 %v221, %v304
    %v306 = vpop.f32.mrb[0].mxu0
    %v307 = vadd.f32 %v223, %v306
    %308 = vdwg.mxu0
    %309 = vrot.lane.b32.xlu0 %v128, 118
    %v310 = vpop.permute.xlu0 %309
    %311 = vrot.lane.b32.xlu0 %v129, 118
    %v312 = vpop.permute.xlu0 %311
    %vm315 = vcmask 121856
    %316 = vst.msk [vmem:[#allocation2] sm:$0xff] %vm315, %v310
    %317 = vst.msk [vmem:[#allocation2 + $0x8] sm:$0xff] %vm315, %v312
    %v318 = vld [vmem:[#allocation5] sm:$0xff]
    %v319 = vld [vmem:[#allocation5 + $0x8] sm:$0xff]
    %322 = vrot.lane.b32.xlu0 %v318, 103
    %v323 = vpop.permute.xlu0 %322
    %324 = vrot.lane.b32.xlu0 %v319, 103
    %v325 = vpop.permute.xlu0 %324
    %328 = vst.msk [vmem:[#allocation2 + $0x10] sm:$0xff] %vm315, %v323
    %329 = vst.msk [vmem:[#allocation2 + $0x18] sm:$0xff] %vm315, %v325
    %v330 = vld [vmem:[#allocation5] sm:$0xff]
    %v331 = vld [vmem:[#allocation5 + $0x8] sm:$0xff]
    %334 = vrot.lane.b32.xlu0 %v330, 88
    %v335 = vpop.permute.xlu0 %334
    %336 = vrot.lane.b32.xlu0 %v331, 88
    %v337 = vpop.permute.xlu0 %336
    %340 = vst.msk [vmem:[#allocation2 + $0x20] sm:$0xff] %vm315, %v335
    %341 = vst.msk [vmem:[#allocation2 + $0x28] sm:$0xff] %vm315, %v337
    %v342 = vld [vmem:[#allocation2] sm:$0xff]
    %v343 = vld [vmem:[#allocation2 + $0x8] sm:$0xff]
    %v344 = vld [vmem:[#allocation2 + $0x10] sm:$0xff]
    %v345 = vld [vmem:[#allocation2 + $0x18] sm:$0xff]
    %v346 = vld [vmem:[#allocation2 + $0x20] sm:$0xff]
    %v347 = vld [vmem:[#allocation2 + $0x28] sm:$0xff]
    %v348 = vld [vmem:[%s4] sm:$0xff]
    %v349 = vld [vmem:[%s4 + $0x8] sm:$0xff]
    %v350 = vld [vmem:[%s4 + $0x10] sm:$0xff]
    %v351 = vld [vmem:[%s4 + $0x18] sm:$0xff]
    %v352 = vld [vmem:[%s4 + $0x20] sm:$0x7f]
    %v353 = vld [vmem:[%s4 + $0x28] sm:$0x7f]
    %v354 = vld [vmem:[%s4 + $0x30] sm:$0x7f]
    %v355 = vld [vmem:[%s4 + $0x38] sm:$0x7f]
    %v357 = vsel %vm315, %v342, 0
    %v360 = vsel %vm315, %v343, 0
    %v363 = vsel %vm315, %v344, 0
    %v366 = vsel %vm315, %v345, 0
    %v369 = vsel %vm315, %v346, 0
    %v372 = vsel %vm315, %v347, 0
    %vm374 = vcmask 1046528
    %v376 = vsel %vm374, %v352, 0
    %v379 = vsel %vm374, %v353, 0
    %v382 = vsel %vm374, %v354, 0
    %v385 = vsel %vm374, %v355, 0
    %387 = vmatprep.subr.mxu0 %v349
    %388 = vmatpush1.msra.mxu0 %v348
    %389 = vmatprep.subr.mxu0 %v379
    %390 = vmatpush1.msra.mxu0 %v376
    %391 = vmatprep.subr.mxu0 0.0
    %392 = vmatpush1.msra.mxu0 0.0
    %393 = vmatprep.subr.mxu0 0.0
    %394 = vmatpush1.msra.mxu0 0.0
    %395 = vmatprep.subr.mxu0 0.0
    %396 = vmatpush1.msra.mxu0 0.0
    %397 = vmatprep.subr.mxu0 0.0
    %398 = vmatpush1.msra.mxu0 0.0
    %399 = vmatprep.subr.mxu0 0.0
    %400 = vmatpush1.msra.mxu0 0.0
    %401 = vmatprep.subr.mxu0 0.0
    %402 = vmatpush1.msra.mxu0 0.0
    %403 = vmatprep.subr.mxu0 0.0
    %404 = vmatpush1.msra.mxu0 0.0
    %405 = vmatprep.subr.mxu0 0.0
    %406 = vmatpush1.msra.mxu0 0.0
    %407 = vmatprep.subr.mxu0 0.0
    %408 = vmatpush1.msra.mxu0 0.0
    %409 = vmatprep.subr.mxu0 0.0
    %410 = vmatpush1.msra.mxu0 0.0
    %411 = vmatprep.subr.mxu0 0.0
    %412 = vmatpush1.msra.mxu0 0.0
    %413 = vmatprep.subr.mxu0 0.0
    %414 = vmatpush1.msra.mxu0 0.0
    %415 = vmatprep.subr.mxu0 0.0
    %416 = vmatpush1.msra.mxu0 0.0
    %417 = vmatprep.subr.mxu0 0.0
    %418 = vmatpush1.msra.mxu0 0.0
    %419 = vmatprep.subr.mxu0 0.0
    %420 = vmatpush1.msra.mxu0 0.0
    %421 = vmatprep.subr.mxu0 0.0
    %422 = vmatpush1.msra.mxu0 0.0
    %423 = vmatprep.subr.mxu0 0.0
    %424 = vmatpush1.msra.mxu0 0.0
    %425 = vmatprep.subr.mxu0 0.0
    %426 = vmatpush1.msra.mxu0 0.0
    %427 = vmatprep.subr.mxu0 0.0
    %428 = vmatpush1.msra.mxu0 0.0
    %429 = vmatprep.subr.mxu0 0.0
    %430 = vmatpush1.msra.mxu0 0.0
    %431 = vmatprep.subr.mxu0 0.0
    %432 = vmatpush1.msra.mxu0 0.0
    %433 = vmatprep.subr.mxu0 0.0
    %434 = vmatpush1.msra.mxu0 0.0
    %435 = vmatprep.subr.mxu0 0.0
    %436 = vmatpush1.msra.mxu0 0.0
    %437 = vmatprep.subr.mxu0 0.0
    %438 = vmatpush1.msra.mxu0 0.0
    %439 = vmatprep.subr.mxu0 0.0
    %440 = vmatpush1.msra.mxu0 0.0
    %441 = vmatprep.subr.mxu0 0.0
    %442 = vmatpush1.msra.mxu0 0.0
    %443 = vmatprep.subr.mxu0 0.0
    %444 = vmatpush1.msra.mxu0 0.0
    %445 = vmatprep.subr.mxu0 0.0
    %446 = vmatpush1.msra.mxu0 0.0
    %447 = vmatprep.subr.mxu0 0.0
    %448 = vmatpush1.msra.mxu0 0.0
    %449 = vmatprep.subr.mxu0 0.0
    %450 = vmatpush1.msra.mxu0 0.0
    %451 = vmatprep.mubr.f32.mxu0 0.0
    %452 = vmatmul.mubr.f32.gmra.mrb[0].mxu0 %v357
    %v453 = vpop.f32.mrb[0].mxu0
    %v454 = vadd.f32 0.0, %v453
    %v455 = vpop.f32.mrb[0].mxu0
    %v456 = vadd.f32 0.0, %v455
    %457 = vmatprep.mubr.f32.mxu0 0.0
    %458 = vmatmul.mubr.f32.gmra.mrb[0].mxu0 %v360
    %v459 = vpop.f32.mrb[0].mxu0
    %v460 = vadd.f32 0.0, %v459
    %v461 = vpop.f32.mrb[0].mxu0
    %v462 = vadd.f32 0.0, %v461
    %463 = vmatprep.mubr.f32.mxu0 0.0
    %464 = vmatmul.mubr.f32.gmra.mrb[0].mxu0 %v363
    %v465 = vpop.f32.mrb[0].mxu0
    %v466 = vadd.f32 0.0, %v465
    %v467 = vpop.f32.mrb[0].mxu0
    %v468 = vadd.f32 0.0, %v467
    %469 = vmatprep.mubr.f32.mxu0 0.0
    %470 = vmatmul.mubr.f32.gmra.mrb[0].mxu0 %v366
    %v471 = vpop.f32.mrb[0].mxu0
    %v472 = vadd.f32 0.0, %v471
    %v473 = vpop.f32.mrb[0].mxu0
    %v474 = vadd.f32 0.0, %v473
    %475 = vmatprep.mubr.f32.mxu0 0.0
    %476 = vmatmul.mubr.f32.gmra.mrb[0].mxu0 %v369
    %v477 = vpop.f32.mrb[0].mxu0
    %v478 = vadd.f32 0.0, %v477
    %v479 = vpop.f32.mrb[0].mxu0
    %v480 = vadd.f32 0.0, %v479
    %481 = vmatprep.mubr.f32.mxu0 0.0
    %482 = vmatmul.mubr.f32.gmra.mrb[0].mxu0 %v372
    %v483 = vpop.f32.mrb[0].mxu0
    %v484 = vadd.f32 0.0, %v483
    %v485 = vpop.f32.mrb[0].mxu0
    %v486 = vadd.f32 0.0, %v485
    %487 = vdwg.mxu0
    %488 = vmatprep.subr.mxu0 %v351
    %489 = vmatpush1.msra.mxu0 %v350
    %490 = vmatprep.subr.mxu0 %v385
    %491 = vmatpush1.msra.mxu0 %v382
    %492 = vmatprep.subr.mxu0 0.0
    %493 = vmatpush1.msra.mxu0 0.0
    %494 = vmatprep.subr.mxu0 0.0
    %495 = vmatpush1.msra.mxu0 0.0
    %496 = vmatprep.subr.mxu0 0.0
    %497 = vmatpush1.msra.mxu0 0.0
    %498 = vmatprep.subr.mxu0 0.0
    %499 = vmatpush1.msra.mxu0 0.0
    %500 = vmatprep.subr.mxu0 0.0
    %501 = vmatpush1.msra.mxu0 0.0
    %502 = vmatprep.subr.mxu0 0.0
    %503 = vmatpush1.msra.mxu0 0.0
    %504 = vmatprep.subr.mxu0 0.0
    %505 = vmatpush1.msra.mxu0 0.0
    %506 = vmatprep.subr.mxu0 0.0
    %507 = vmatpush1.msra.mxu0 0.0
    %508 = vmatprep.subr.mxu0 0.0
    %509 = vmatpush1.msra.mxu0 0.0
    %510 = vmatprep.subr.mxu0 0.0
    %511 = vmatpush1.msra.mxu0 0.0
    %512 = vmatprep.subr.mxu0 0.0
    %513 = vmatpush1.msra.mxu0 0.0
    %514 = vmatprep.subr.mxu0 0.0
    %515 = vmatpush1.msra.mxu0 0.0
    %516 = vmatprep.subr.mxu0 0.0
    %517 = vmatpush1.msra.mxu0 0.0
    %518 = vmatprep.subr.mxu0 0.0
    %519 = vmatpush1.msra.mxu0 0.0
    %520 = vmatprep.subr.mxu0 0.0
    %521 = vmatpush1.msra.mxu0 0.0
    %522 = vmatprep.subr.mxu0 0.0
    %523 = vmatpush1.msra.mxu0 0.0
    %524 = vmatprep.subr.mxu0 0.0
    %525 = vmatpush1.msra.mxu0 0.0
    %526 = vmatprep.subr.mxu0 0.0
    %527 = vmatpush1.msra.mxu0 0.0
    %528 = vmatprep.subr.mxu0 0.0
    %529 = vmatpush1.msra.mxu0 0.0
    %530 = vmatprep.subr.mxu0 0.0
    %531 = vmatpush1.msra.mxu0 0.0
    %532 = vmatprep.subr.mxu0 0.0
    %533 = vmatpush1.msra.mxu0 0.0
    %534 = vmatprep.subr.mxu0 0.0
    %535 = vmatpush1.msra.mxu0 0.0
    %536 = vmatprep.subr.mxu0 0.0
    %537 = vmatpush1.msra.mxu0 0.0
    %538 = vmatprep.subr.mxu0 0.0
    %539 = vmatpush1.msra.mxu0 0.0
    %540 = vmatprep.subr.mxu0 0.0
    %541 = vmatpush1.msra.mxu0 0.0
    %542 = vmatprep.subr.mxu0 0.0
    %543 = vmatpush1.msra.mxu0 0.0
    %544 = vmatprep.subr.mxu0 0.0
    %545 = vmatpush1.msra.mxu0 0.0
    %546 = vmatprep.subr.mxu0 0.0
    %547 = vmatpush1.msra.mxu0 0.0
    %548 = vmatprep.subr.mxu0 0.0
    %549 = vmatpush1.msra.mxu0 0.0
    %550 = vmatprep.subr.mxu0 0.0
    %551 = vmatpush1.msra.mxu0 0.0
    %552 = vmatprep.mubr.f32.mxu0 0.0
    %553 = vmatmul.mubr.f32.gmra.mrb[0].mxu0 %v357
    %v554 = vpop.f32.mrb[0].mxu0
    %v555 = vadd.f32 0.0, %v554
    %v556 = vpop.f32.mrb[0].mxu0
    %v557 = vadd.f32 0.0, %v556
    %558 = vmatprep.mubr.f32.mxu0 0.0
    %559 = vmatmul.mubr.f32.gmra.mrb[0].mxu0 %v360
    %v560 = vpop.f32.mrb[0].mxu0
    %v561 = vadd.f32 0.0, %v560
    %v562 = vpop.f32.mrb[0].mxu0
    %v563 = vadd.f32 0.0, %v562
    %564 = vmatprep.mubr.f32.mxu0 0.0
    %565 = vmatmul.mubr.f32.gmra.mrb[0].mxu0 %v363
    %v566 = vpop.f32.mrb[0].mxu0
    %v567 = vadd.f32 0.0, %v566
    %v568 = vpop.f32.mrb[0].mxu0
    %v569 = vadd.f32 0.0, %v568
    %570 = vmatprep.mubr.f32.mxu0 0.0
    %571 = vmatmul.mubr.f32.gmra.mrb[0].mxu0 %v366
    %v572 = vpop.f32.mrb[0].mxu0
    %v573 = vadd.f32 0.0, %v572
    %v574 = vpop.f32.mrb[0].mxu0
    %v575 = vadd.f32 0.0, %v574
    %576 = vmatprep.mubr.f32.mxu0 0.0
    %577 = vmatmul.mubr.f32.gmra.mrb[0].mxu0 %v369
    %v578 = vpop.f32.mrb[0].mxu0
    %v579 = vadd.f32 0.0, %v578
    %v580 = vpop.f32.mrb[0].mxu0
    %v581 = vadd.f32 0.0, %v580
    %582 = vmatprep.mubr.f32.mxu0 0.0
    %583 = vmatmul.mubr.f32.gmra.mrb[0].mxu0 %v372
    %v584 = vpop.f32.mrb[0].mxu0
    %v585 = vadd.f32 0.0, %v584
    %v586 = vpop.f32.mrb[0].mxu0
    %v587 = vadd.f32 0.0, %v586
    %588 = vdwg.mxu0
    %589 = vst [vmem:[#allocation3] sm:$0xff] %v454
    %590 = vst [vmem:[#allocation3 + $0x8] sm:$0xff] %v456
    %591 = vst [vmem:[#allocation3 + $0x10] sm:$0xff] %v555
    %592 = vst [vmem:[#allocation3 + $0x18] sm:$0xff] %v557
    %593 = vst [vmem:[#allocation3 + $0x20] sm:$0xff] %v460
    %594 = vst [vmem:[#allocation3 + $0x28] sm:$0xff] %v462
    %595 = vst [vmem:[#allocation3 + $0x30] sm:$0xff] %v561
    %596 = vst [vmem:[#allocation3 + $0x38] sm:$0xff] %v563
    %597 = vst [vmem:[#allocation3 + $0x40] sm:$0xff] %v466
    %598 = vst [vmem:[#allocation3 + $0x48] sm:$0xff] %v468
    %599 = vst [vmem:[#allocation3 + $0x50] sm:$0xff] %v567
    %600 = vst [vmem:[#allocation3 + $0x58] sm:$0xff] %v569
    %601 = vst [vmem:[#allocation3 + $0x60] sm:$0xff] %v472
    %602 = vst [vmem:[#allocation3 + $0x68] sm:$0xff] %v474
    %603 = vst [vmem:[#allocation3 + $0x70] sm:$0xff] %v573
    %604 = vst [vmem:[#allocation3 + $0x78] sm:$0xff] %v575
    %605 = vst [vmem:[#allocation3 + $0x80] sm:$0xff] %v478
    %606 = vst [vmem:[#allocation3 + $0x88] sm:$0xff] %v480
    %607 = vst [vmem:[#allocation3 + $0x90] sm:$0xff] %v579
    %608 = vst [vmem:[#allocation3 + $0x98] sm:$0xff] %v581
    %609 = vst [vmem:[#allocation3 + $0xa0] sm:$0xff] %v484
    %610 = vst [vmem:[#allocation3 + $0xa8] sm:$0xff] %v486
    %611 = vst [vmem:[#allocation3 + $0xb0] sm:$0xff] %v585
    %612 = vst [vmem:[#allocation3 + $0xb8] sm:$0xff] %v587
    %v613 = vld [vmem:[#allocation3] sm:$0xff]
    %v614 = vld [vmem:[#allocation3 + $0x8] sm:$0xff]
    %v615 = vld [vmem:[#allocation3 + $0x20] sm:$0xff]
    %v616 = vld [vmem:[#allocation3 + $0x28] sm:$0xff]
    %v617 = vadd.f32 %v299, %v613
    %v618 = vadd.f32 %v301, %v614
    %v619 = vadd.f32 %v305, %v615
    %v620 = vadd.f32 %v307, %v616
    %v621 = vld [vmem:[#allocation3 + $0x50] sm:$0xff]
    %v622 = vld [vmem:[#allocation3 + $0x58] sm:$0xff]
    %v623 = vld [vmem:[#allocation3 + $0x70] sm:$0xff]
    %v624 = vld [vmem:[#allocation3 + $0x78] sm:$0xff]
    %v625 = vadd.f32 %v617, %v621
    %v626 = vadd.f32 %v618, %v622
    %v627 = vadd.f32 %v619, %v623
    %v628 = vadd.f32 %v620, %v624
    %v629 = vld [vmem:[#allocation11] ss:$8 sm:$0x3]
    %v631 = vlaneseq
    %v632 = vshrl.u32 %v631, 7
    %v633 = vsub.s32 0, %v632
    %v634 = vrot.slane %v629, %v633
    %v635 = vlaneseq
    %v636 = vshrl.u32 %v635, 7
    %v637 = vsub.s32 1, %v636
    %v638 = vrot.slane %v629, %v637
    %v641 = vadd.f32 %v625, %v634
    %v642 = vadd.f32 %v626, %v638
    %v643 = vadd.f32 %v627, %v634
    %v644 = vadd.f32 %v628, %v638
    %v645 = vmax.f32 %v641, 0.0
    %v646 = vmax.f32 %v642, 0.0
    %v647 = vmax.f32 %v643, 0.0
    %v648 = vmax.f32 %v644, 0.0
    %649 = vst [vmem:[#allocation4] sm:$0xff] %v645
    %650 = vst [vmem:[#allocation4 + $0x8] sm:$0xff] %v646
    %651 = vst [vmem:[#allocation4 + $0x10] sm:$0xff] %v647
    %652 = vst [vmem:[#allocation4 + $0x18] sm:$0xff] %v648
    %v653 = vld [vmem:[#allocation3] sm:$0xff]
    %v654 = vld [vmem:[#allocation3 + $0x8] sm:$0xff]
    %v655 = vld [vmem:[#allocation3 + $0x20] sm:$0xff]
    %v656 = vld [vmem:[#allocation3 + $0x28] sm:$0xff]
    %v657 = vadd.f32 %v299, %v653
    %v658 = vadd.f32 %v301, %v654
    %v659 = vadd.f32 %v305, %v655
    %v660 = vadd.f32 %v307, %v656
    %v661 = vld [vmem:[#allocation3 + $0x90] sm:$0xff]
    %v662 = vld [vmem:[#allocation3 + $0x98] sm:$0xff]
    %v663 = vld [vmem:[#allocation3 + $0xb0] sm:$0xff]
    %v664 = vld [vmem:[#allocation3 + $0xb8] sm:$0xff]
    %v665 = vadd.f32 %v657, %v661
    %v666 = vadd.f32 %v658, %v662
    %v667 = vadd.f32 %v659, %v663
    %v668 = vadd.f32 %v660, %v664
    %s669 = scalar_lea.vmem [#allocation11], 1
    %v670 = vld [vmem:[%s669] ss:$8 sm:$0x3]
    %v672 = vlaneseq
    %v673 = vshrl.u32 %v672, 7
    %v674 = vsub.s32 0, %v673
    %v675 = vrot.slane %v670, %v674
    %v676 = vlaneseq
    %v677 = vshrl.u32 %v676, 7
    %v678 = vsub.s32 1, %v677
    %v679 = vrot.slane %v670, %v678
    %v682 = vadd.f32 %v665, %v675
    %v683 = vadd.f32 %v666, %v679
    %v684 = vadd.f32 %v667, %v675
    %v685 = vadd.f32 %v668, %v679
    %v686 = vmax.f32 %v682, 0.0
    %v687 = vmax.f32 %v683, 0.0
    %v688 = vmax.f32 %v684, 0.0
    %v689 = vmax.f32 %v685, 0.0
    %690 = vst [vmem:[#allocation4 + $0x20] sm:$0xff] %v686
    %691 = vst [vmem:[#allocation4 + $0x28] sm:$0xff] %v687
    %692 = vst [vmem:[#allocation4 + $0x30] sm:$0xff] %v688
    %693 = vst [vmem:[#allocation4 + $0x38] sm:$0xff] %v689
    %v694 = vld [vmem:[#allocation3 + $0x40] sm:$0xff]
    %v695 = vld [vmem:[#allocation3 + $0x48] sm:$0xff]
    %v696 = vld [vmem:[#allocation3 + $0x60] sm:$0xff]
    %v697 = vld [vmem:[#allocation3 + $0x68] sm:$0xff]
    %v698 = vadd.f32 %v299, %v694
    %v699 = vadd.f32 %v301, %v695
    %v700 = vadd.f32 %v305, %v696
    %v701 = vadd.f32 %v307, %v697
    %v702 = vld [vmem:[#allocation3 + $0x10] sm:$0xff]
    %v703 = vld [vmem:[#allocation3 + $0x18] sm:$0xff]
    %v704 = vld [vmem:[#allocation3 + $0x30] sm:$0xff]
    %v705 = vld [vmem:[#allocation3 + $0x38] sm:$0xff]
    %v706 = vadd.f32 %v698, %v702
    %v707 = vadd.f32 %v699, %v703
    %v708 = vadd.f32 %v700, %v704
    %v709 = vadd.f32 %v701, %v705
    %s710 = scalar_lea.vmem [#allocation11], 2
    %v711 = vld [vmem:[%s710] ss:$8 sm:$0x3]
    %v713 = vlaneseq
    %v714 = vshrl.u32 %v713, 7
    %v715 = vsub.s32 0, %v714
    %v716 = vrot.slane %v711, %v715
    %v717 = vlaneseq
    %v718 = vshrl.u32 %v717, 7
    %v719 = vsub.s32 1, %v718
    %v720 = vrot.slane %v711, %v719
    %v723 = vadd.f32 %v706, %v716
    %v724 = vadd.f32 %v707, %v720
    %v725 = vadd.f32 %v708, %v716
    %v726 = vadd.f32 %v709, %v720
    %v727 = vmax.f32 %v723, 0.0
    %v728 = vmax.f32 %v724, 0.0
    %v729 = vmax.f32 %v725, 0.0
    %v730 = vmax.f32 %v726, 0.0
    %731 = vst [vmem:[#allocation4 + $0x40] sm:$0xff] %v727
    %732 = vst [vmem:[#allocation4 + $0x48] sm:$0xff] %v728
    %733 = vst [vmem:[#allocation4 + $0x50] sm:$0xff] %v729
    %734 = vst [vmem:[#allocation4 + $0x58] sm:$0xff] %v730
    %v735 = vld [vmem:[#allocation3 + $0x40] sm:$0xff]
    %v736 = vld [vmem:[#allocation3 + $0x48] sm:$0xff]
    %v737 = vld [vmem:[#allocation3 + $0x60] sm:$0xff]
    %v738 = vld [vmem:[#allocation3 + $0x68] sm:$0xff]
    %v739 = vadd.f32 %v299, %v735
    %v740 = vadd.f32 %v301, %v736
    %v741 = vadd.f32 %v305, %v737
    %v742 = vadd.f32 %v307, %v738
    %v743 = vld [vmem:[#allocation3 + $0x90] sm:$0xff]
    %v744 = vld [vmem:[#allocation3 + $0x98] sm:$0xff]
    %v745 = vld [vmem:[#allocation3 + $0xb0] sm:$0xff]
    %v746 = vld [vmem:[#allocation3 + $0xb8] sm:$0xff]
    %v747 = vadd.f32 %v739, %v743
    %v748 = vadd.f32 %v740, %v744
    %v749 = vadd.f32 %v741, %v745
    %v750 = vadd.f32 %v742, %v746
    %s751 = scalar_lea.vmem [#allocation11], 3
    %v752 = vld [vmem:[%s751] ss:$8 sm:$0x3]
    %v754 = vlaneseq
    %v755 = vshrl.u32 %v754, 7
    %v756 = vsub.s32 0, %v755
    %v757 = vrot.slane %v752, %v756
    %v758 = vlaneseq
    %v759 = vshrl.u32 %v758, 7
    %v760 = vsub.s32 1, %v759
    %v761 = vrot.slane %v752, %v760
    %v764 = vadd.f32 %v747, %v757
    %v765 = vadd.f32 %v748, %v761
    %v766 = vadd.f32 %v749, %v757
    %v767 = vadd.f32 %v750, %v761
    %v768 = vmax.f32 %v764, 0.0
    %v769 = vmax.f32 %v765, 0.0
    %v770 = vmax.f32 %v766, 0.0
    %v771 = vmax.f32 %v767, 0.0
    %772 = vst [vmem:[#allocation4 + $0x60] sm:$0xff] %v768
    %773 = vst [vmem:[#allocation4 + $0x68] sm:$0xff] %v769
    %774 = vst [vmem:[#allocation4 + $0x70] sm:$0xff] %v770
    %775 = vst [vmem:[#allocation4 + $0x78] sm:$0xff] %v771
    %v776 = vld [vmem:[#allocation3 + $0x80] sm:$0xff]
    %v777 = vld [vmem:[#allocation3 + $0x88] sm:$0xff]
    %v778 = vld [vmem:[#allocation3 + $0xa0] sm:$0xff]
    %v779 = vld [vmem:[#allocation3 + $0xa8] sm:$0xff]
    %v780 = vadd.f32 %v299, %v776
    %v781 = vadd.f32 %v301, %v777
    %v782 = vadd.f32 %v305, %v778
    %v783 = vadd.f32 %v307, %v779
    %v784 = vld [vmem:[#allocation3 + $0x10] sm:$0xff]
    %v785 = vld [vmem:[#allocation3 + $0x18] sm:$0xff]
    %v786 = vld [vmem:[#allocation3 + $0x30] sm:$0xff]
    %v787 = vld [vmem:[#allocation3 + $0x38] sm:$0xff]
    %v788 = vadd.f32 %v780, %v784
    %v789 = vadd.f32 %v781, %v785
    %v790 = vadd.f32 %v782, %v786
    %v791 = vadd.f32 %v783, %v787
    %s792 = scalar_lea.vmem [#allocation11], 4
    %v793 = vld [vmem:[%s792] ss:$8 sm:$0x3]
    %v795 = vlaneseq
    %v796 = vshrl.u32 %v795, 7
    %v797 = vsub.s32 0, %v796
    %v798 = vrot.slane %v793, %v797
    %v799 = vlaneseq
    %v800 = vshrl.u32 %v799, 7
    %v801 = vsub.s32 1, %v800
    %v802 = vrot.slane %v793, %v801
    %v805 = vadd.f32 %v788, %v798
    %v806 = vadd.f32 %v789, %v802
    %v807 = vadd.f32 %v790, %v798
    %v808 = vadd.f32 %v791, %v802
    %v809 = vmax.f32 %v805, 0.0
    %v810 = vmax.f32 %v806, 0.0
    %v811 = vmax.f32 %v807, 0.0
    %v812 = vmax.f32 %v808, 0.0
    %813 = vst [vmem:[#allocation4 + $0x80] sm:$0xff] %v809
    %814 = vst [vmem:[#allocation4 + $0x88] sm:$0xff] %v810
    %815 = vst [vmem:[#allocation4 + $0x90] sm:$0xff] %v811
    %816 = vst [vmem:[#allocation4 + $0x98] sm:$0xff] %v812
    %v817 = vld [vmem:[#allocation3 + $0x80] sm:$0xff]
    %v818 = vld [vmem:[#allocation3 + $0x88] sm:$0xff]
    %v819 = vld [vmem:[#allocation3 + $0xa0] sm:$0xff]
    %v820 = vld [vmem:[#allocation3 + $0xa8] sm:$0xff]
    %v821 = vadd.f32 %v299, %v817
    %v822 = vadd.f32 %v301, %v818
    %v823 = vadd.f32 %v305, %v819
    %v824 = vadd.f32 %v307, %v820
    %v825 = vld [vmem:[#allocation3 + $0x50] sm:$0xff]
    %v826 = vld [vmem:[#allocation3 + $0x58] sm:$0xff]
    %v827 = vld [vmem:[#allocation3 + $0x70] sm:$0xff]
    %v828 = vld [vmem:[#allocation3 + $0x78] sm:$0xff]
    %v829 = vadd.f32 %v821, %v825
    %v830 = vadd.f32 %v822, %v826
    %v831 = vadd.f32 %v823, %v827
    %v832 = vadd.f32 %v824, %v828
    %s833 = scalar_lea.vmem [#allocation11], 5
    %v834 = vld [vmem:[%s833] ss:$8 sm:$0x3]
    %v836 = vlaneseq
    %v837 = vshrl.u32 %v836, 7
    %v838 = vsub.s32 0, %v837
    %v839 = vrot.slane %v834, %v838
    %v840 = vlaneseq
    %v841 = vshrl.u32 %v840, 7
    %v842 = vsub.s32 1, %v841
    %v843 = vrot.slane %v834, %v842
    %v846 = vadd.f32 %v829, %v839
    %v847 = vadd.f32 %v830, %v843
    %v848 = vadd.f32 %v831, %v839
    %v849 = vadd.f32 %v832, %v843
    %v850 = vmax.f32 %v846, 0.0
    %v851 = vmax.f32 %v847, 0.0
    %v852 = vmax.f32 %v848, 0.0
    %v853 = vmax.f32 %v849, 0.0
    %854 = vst [vmem:[#allocation4 + $0xa0] sm:$0xff] %v850
    %855 = vst [vmem:[#allocation4 + $0xa8] sm:$0xff] %v851
    %856 = vst [vmem:[#allocation4 + $0xb0] sm:$0xff] %v852
    %857 = vst [vmem:[#allocation4 + $0xb8] sm:$0xff] %v853
    %v858 = vld [vmem:[#allocation4] sm:$0xff]
    %v859 = vld [vmem:[#allocation4 + $0x8] sm:$0xff]
    %v860 = vld [vmem:[#allocation4 + $0x10] sm:$0xff]
    %v861 = vld [vmem:[#allocation4 + $0x18] sm:$0xff]
    %v862 = vld [vmem:[#allocation4 + $0x20] sm:$0xff]
    %v863 = vld [vmem:[#allocation4 + $0x28] sm:$0xff]
    %v864 = vld [vmem:[#allocation4 + $0x30] sm:$0xff]
    %v865 = vld [vmem:[#allocation4 + $0x38] sm:$0xff]
    %v866 = vld [vmem:[#allocation4 + $0x40] sm:$0xff]
    %v867 = vld [vmem:[#allocation4 + $0x48] sm:$0xff]
    %v868 = vld [vmem:[#allocation4 + $0x50] sm:$0xff]
    %v869 = vld [vmem:[#allocation4 + $0x58] sm:$0xff]
    %v870 = vld [vmem:[#allocation4 + $0x60] sm:$0xff]
    %v871 = vld [vmem:[#allocation4 + $0x68] sm:$0xff]
    %v872 = vld [vmem:[#allocation4 + $0x70] sm:$0xff]
    %v873 = vld [vmem:[#allocation4 + $0x78] sm:$0xff]
    %v874 = vld [vmem:[#allocation4 + $0x80] sm:$0xff]
    %v875 = vld [vmem:[#allocation4 + $0x88] sm:$0xff]
    %v876 = vld [vmem:[#allocation4 + $0x90] sm:$0xff]
    %v877 = vld [vmem:[#allocation4 + $0x98] sm:$0xff]
    %v878 = vld [vmem:[#allocation4 + $0xa0] sm:$0xff]
    %v879 = vld [vmem:[#allocation4 + $0xa8] sm:$0xff]
    %v880 = vld [vmem:[#allocation4 + $0xb0] sm:$0xff]
    %v881 = vld [vmem:[#allocation4 + $0xb8] sm:$0xff]
    %v882 = vld [vmem:[%s6] sm:$0xff]
    %v883 = vld [vmem:[%s6 + $0x8] sm:$0xff]
    %v884 = vld [vmem:[%s6 + $0x10] sm:$0xff]
    %v885 = vld [vmem:[%s6 + $0x18] sm:$0xff]
    %v886 = vld [vmem:[%s6 + $0x20] sm:$0xff]
    %v887 = vld [vmem:[%s6 + $0x28] sm:$0xff]
    %v888 = vld [vmem:[%s6 + $0x30] sm:$0xff]
    %v889 = vld [vmem:[%s6 + $0x38] sm:$0xff]
    %v890 = vld [vmem:[%s6 + $0x40] sm:$0xff]
    %v891 = vld [vmem:[%s6 + $0x48] sm:$0xff]
    %v892 = vld [vmem:[%s6 + $0x50] sm:$0xff]
    %v893 = vld [vmem:[%s6 + $0x58] sm:$0xff]
    %v894 = vld [vmem:[%s6 + $0x60] sm:$0xff]
    %v895 = vld [vmem:[%s6 + $0x68] sm:$0xff]
    %v896 = vld [vmem:[%s6 + $0x70] sm:$0xff]
    %v897 = vld [vmem:[%s6 + $0x78] sm:$0xff]
    %v898 = vld [vmem:[%s6 + $0x80] sm:$0xff]
    %v899 = vld [vmem:[%s6 + $0x88] sm:$0xff]
    %v900 = vld [vmem:[%s6 + $0x90] sm:$0xff]
    %v901 = vld [vmem:[%s6 + $0x98] sm:$0xff]
    %v902 = vld [vmem:[%s6 + $0xa0] sm:$0xff]
    %v903 = vld [vmem:[%s6 + $0xa8] sm:$0xff]
    %v904 = vld [vmem:[%s6 + $0xb0] sm:$0xff]
    %v905 = vld [vmem:[%s6 + $0xb8] sm:$0xff]
    %v906 = vld [vmem:[%s6 + $0xc0] sm:$0xff]
    %v907 = vld [vmem:[%s6 + $0xc8] sm:$0xff]
    %v908 = vld [vmem:[%s6 + $0xd0] sm:$0xff]
    %v909 = vld [vmem:[%s6 + $0xd8] sm:$0xff]
    %v910 = vld [vmem:[%s6 + $0xe0] sm:$0xff]
    %v911 = vld [vmem:[%s6 + $0xe8] sm:$0xff]
    %v912 = vld [vmem:[%s6 + $0xf0] sm:$0xff]
    %v913 = vld [vmem:[%s6 + $0xf8] sm:$0xff]
    %v914 = vld [vmem:[%s7] sm:$0x1]
    %v916 = vlaneseq
    %v917 = vshrl.u32 %v916, 7
    %v918 = vsub.s32 0, %v917
    %v919 = vrot.slane %v914, %v918
    %921 = vmatprep.subr.mxu0 0.0
    %922 = vmatpush1.msra.mxu0 %v882
    %923 = vmatprep.subr.mxu0 0.0
    %924 = vmatpush1.msra.mxu0 %v883
    %925 = vmatprep.subr.mxu0 0.0
    %926 = vmatpush1.msra.mxu0 %v884
    %927 = vmatprep.subr.mxu0 0.0
    %928 = vmatpush1.msra.mxu0 %v885
    %929 = vmatprep.subr.mxu0 0.0
    %930 = vmatpush1.msra.mxu0 %v886
    %931 = vmatprep.subr.mxu0 0.0
    %932 = vmatpush1.msra.mxu0 %v887
    %933 = vmatprep.subr.mxu0 0.0
    %934 = vmatpush1.msra.mxu0 %v888
    %935 = vmatprep.subr.mxu0 0.0
    %936 = vmatpush1.msra.mxu0 %v889
    %937 = vmatprep.subr.mxu0 0.0
    %938 = vmatpush1.msra.mxu0 %v890
    %939 = vmatprep.subr.mxu0 0.0
    %940 = vmatpush1.msra.mxu0 %v891
    %941 = vmatprep.subr.mxu0 0.0
    %942 = vmatpush1.msra.mxu0 %v892
    %943 = vmatprep.subr.mxu0 0.0
    %944 = vmatpush1.msra.mxu0 %v893
    %945 = vmatprep.subr.mxu0 0.0
    %946 = vmatpush1.msra.mxu0 %v894
    %947 = vmatprep.subr.mxu0 0.0
    %948 = vmatpush1.msra.mxu0 %v895
    %949 = vmatprep.subr.mxu0 0.0
    %950 = vmatpush1.msra.mxu0 %v896
    %951 = vmatprep.subr.mxu0 0.0
    %952 = vmatpush1.msra.mxu0 %v897
    %953 = vmatprep.subr.mxu0 0.0
    %954 = vmatpush1.msra.mxu0 %v898
    %955 = vmatprep.subr.mxu0 0.0
    %956 = vmatpush1.msra.mxu0 %v899
    %957 = vmatprep.subr.mxu0 0.0
    %958 = vmatpush1.msra.mxu0 %v900
    %959 = vmatprep.subr.mxu0 0.0
    %960 = vmatpush1.msra.mxu0 %v901
    %961 = vmatprep.subr.mxu0 0.0
    %962 = vmatpush1.msra.mxu0 %v902
    %963 = vmatprep.subr.mxu0 0.0
    %964 = vmatpush1.msra.mxu0 %v903
    %965 = vmatprep.subr.mxu0 0.0
    %966 = vmatpush1.msra.mxu0 %v904
    %967 = vmatprep.subr.mxu0 0.0
    %968 = vmatpush1.msra.mxu0 %v905
    %969 = vmatprep.subr.mxu0 0.0
    %970 = vmatpush1.msra.mxu0 %v906
    %971 = vmatprep.subr.mxu0 0.0
    %972 = vmatpush1.msra.mxu0 %v907
    %973 = vmatprep.subr.mxu0 0.0
    %974 = vmatpush1.msra.mxu0 %v908
    %975 = vmatprep.subr.mxu0 0.0
    %976 = vmatpush1.msra.mxu0 %v909
    %977 = vmatprep.subr.mxu0 0.0
    %978 = vmatpush1.msra.mxu0 %v910
    %979 = vmatprep.subr.mxu0 0.0
    %980 = vmatpush1.msra.mxu0 %v911
    %981 = vmatprep.subr.mxu0 0.0
    %982 = vmatpush1.msra.mxu0 %v912
    %983 = vmatprep.subr.mxu0 0.0
    %984 = vmatpush1.msra.mxu0 %v913
    %985 = vmatprep.mubr.f32.mxu0 %v859
    %986 = vmatmul.mubr.f32.gmra.mrb[0].mxu0 %v858
    %v987 = vpop.f32.mrb[0].mxu0
    %v988 = vadd.f32 %v919, %v987
    %v989 = vpop.f32.mrb[0].mxu0
    %990 = vmatprep.mubr.f32.mxu0 %v861
    %991 = vmatmul.mubr.f32.gmra.mrb[0].mxu0 %v860
    %v992 = vpop.f32.mrb[0].mxu0
    %v993 = vadd.f32 %v919, %v992
    %v994 = vpop.f32.mrb[0].mxu0
    %995 = vmatprep.mubr.f32.mxu0 %v863
    %996 = vmatmul.mubr.f32.gmra.mrb[0].mxu0 %v862
    %v997 = vpop.f32.mrb[0].mxu0
    %v998 = vadd.f32 %v919, %v997
    %v999 = vpop.f32.mrb[0].mxu0
    %1000 = vmatprep.mubr.f32.mxu0 %v865
    %1001 = vmatmul.mubr.f32.gmra.mrb[0].mxu0 %v864
    %v1002 = vpop.f32.mrb[0].mxu0
    %v1003 = vadd.f32 %v919, %v1002
    %v1004 = vpop.f32.mrb[0].mxu0
    %1005 = vmatprep.mubr.f32.mxu0 %v867
    %1006 = vmatmul.mubr.f32.gmra.mrb[0].mxu0 %v866
    %v1007 = vpop.f32.mrb[0].mxu0
    %v1008 = vadd.f32 %v919, %v1007
    %v1009 = vpop.f32.mrb[0].mxu0
    %1010 = vmatprep.mubr.f32.mxu0 %v869
    %1011 = vmatmul.mubr.f32.gmra.mrb[0].mxu0 %v868
    %v1012 = vpop.f32.mrb[0].mxu0
    %v1013 = vadd.f32 %v919, %v1012
    %v1014 = vpop.f32.mrb[0].mxu0
    %1015 = vmatprep.mubr.f32.mxu0 %v871
    %1016 = vmatmul.mubr.f32.gmra.mrb[0].mxu0 %v870
    %v1017 = vpop.f32.mrb[0].mxu0
    %v1018 = vadd.f32 %v919, %v1017
    %v1019 = vpop.f32.mrb[0].mxu0
    %1020 = vmatprep.mubr.f32.mxu0 %v873
    %1021 = vmatmul.mubr.f32.gmra.mrb[0].mxu0 %v872
    %v1022 = vpop.f32.mrb[0].mxu0
    %v1023 = vadd.f32 %v919, %v1022
    %v1024 = vpop.f32.mrb[0].mxu0
    %1025 = vmatprep.mubr.f32.mxu0 %v875
    %1026 = vmatmul.mubr.f32.gmra.mrb[0].mxu0 %v874
    %v1027 = vpop.f32.mrb[0].mxu0
    %v1028 = vadd.f32 %v919, %v1027
    %v1029 = vpop.f32.mrb[0].mxu0
    %1030 = vmatprep.mubr.f32.mxu0 %v877
    %1031 = vmatmul.mubr.f32.gmra.mrb[0].mxu0 %v876
    %v1032 = vpop.f32.mrb[0].mxu0
    %v1033 = vadd.f32 %v919, %v1032
    %v1034 = vpop.f32.mrb[0].mxu0
    %1035 = vmatprep.mubr.f32.mxu0 %v879
    %1036 = vmatmul.mubr.f32.gmra.mrb[0].mxu0 %v878
    %v1037 = vpop.f32.mrb[0].mxu0
    %v1038 = vadd.f32 %v919, %v1037
    %v1039 = vpop.f32.mrb[0].mxu0
    %1040 = vmatprep.mubr.f32.mxu0 %v881
    %1041 = vmatmul.mubr.f32.gmra.mrb[0].mxu0 %v880
    %v1042 = vpop.f32.mrb[0].mxu0
    %v1043 = vadd.f32 %v919, %v1042
    %v1044 = vpop.f32.mrb[0].mxu0
    %1045 = vdwg.mxu0
    %v1046 = vmax.f32 %v988, 0.0
    %v1047 = vmax.f32 %v993, 0.0
    %v1048 = vmax.f32 %v998, 0.0
    %v1049 = vmax.f32 %v1003, 0.0
    %v1050 = vmax.f32 %v1008, 0.0
    %v1051 = vmax.f32 %v1013, 0.0
    %v1052 = vmax.f32 %v1018, 0.0
    %v1053 = vmax.f32 %v1023, 0.0
    %v1054 = vmax.f32 %v1028, 0.0
    %v1055 = vmax.f32 %v1033, 0.0
    %v1056 = vmax.f32 %v1038, 0.0
    %v1057 = vmax.f32 %v1043, 0.0
    %v1058 = vadd.f32 %v1046, %v1048
    %v1059 = vadd.f32 %v1047, %v1049
    %v1060 = vadd.f32 %v1058, %v1050
    %v1061 = vadd.f32 %v1059, %v1051
    %v1062 = vadd.f32 %v1060, %v1052
    %v1063 = vadd.f32 %v1061, %v1053
    %v1064 = vadd.f32 %v1062, %v1054
    %v1065 = vadd.f32 %v1063, %v1055
    %v1066 = vadd.f32 %v1064, %v1056
    %v1067 = vadd.f32 %v1065, %v1057
    %v1068 = vld [vmem:[%s8] sm:$0xff]
    %v1069 = vld [vmem:[%s8 + $0x8] sm:$0xff]
    %v1070 = vld [vmem:[%s8 + $0x10] sm:$0xff]
    %v1071 = vld [vmem:[%s8 + $0x18] sm:$0xff]
    %v1072 = vld [vmem:[%s8 + $0x20] sm:$0xff]
    %v1073 = vld [vmem:[%s8 + $0x28] sm:$0xff]
    %v1074 = vld [vmem:[%s8 + $0x30] sm:$0xff]
    %v1075 = vld [vmem:[%s8 + $0x38] sm:$0xff]
    %v1076 = vld [vmem:[%s8 + $0x40] sm:$0xff]
    %v1077 = vld [vmem:[%s8 + $0x48] sm:$0xff]
    %v1078 = vld [vmem:[%s8 + $0x50] sm:$0xff]
    %v1079 = vld [vmem:[%s8 + $0x58] sm:$0xff]
    %v1080 = vld [vmem:[%s8 + $0x60] sm:$0xff]
    %v1081 = vld [vmem:[%s8 + $0x68] sm:$0xff]
    %v1082 = vld [vmem:[%s8 + $0x70] sm:$0xff]
    %v1083 = vld [vmem:[%s8 + $0x78] sm:$0xff]
    %v1084 = vld [vmem:[%s9] sm:$0x3]
    %v1086 = vlaneseq
    %v1087 = vshrl.u32 %v1086, 7
    %v1088 = vsub.s32 0, %v1087
    %v1089 = vrot.slane %v1084, %v1088
    %v1090 = vlaneseq
    %v1091 = vshrl.u32 %v1090, 7
    %v1092 = vsub.s32 1, %v1091
    %v1093 = vrot.slane %v1084, %v1092
    %vm1096 = vcmask 523264
    %v1098 = vsel %vm1096, %v1066, 0
    %v1101 = vsel %vm1096, %v1067, 0
    %1103 = vmatprep.subr.mxu0 %v1069
    %1104 = vmatpush1.msra.mxu0 %v1068
    %1105 = vmatprep.subr.mxu0 %v1071
    %1106 = vmatpush1.msra.mxu0 %v1070
    %1107 = vmatprep.subr.mxu0 %v1073
    %1108 = vmatpush1.msra.mxu0 %v1072
    %1109 = vmatprep.subr.mxu0 %v1075
    %1110 = vmatpush1.msra.mxu0 %v1074
    %1111 = vmatprep.subr.mxu0 %v1077
    %1112 = vmatpush1.msra.mxu0 %v1076
    %1113 = vmatprep.subr.mxu0 %v1079
    %1114 = vmatpush1.msra.mxu0 %v1078
    %1115 = vmatprep.subr.mxu0 %v1081
    %1116 = vmatpush1.msra.mxu0 %v1080
    %1117 = vmatprep.subr.mxu0 %v1083
    %1118 = vmatpush1.msra.mxu0 %v1082
    %1119 = vmatprep.subr.mxu0 0.0
    %1120 = vmatpush1.msra.mxu0 0.0
    %1121 = vmatprep.subr.mxu0 0.0
    %1122 = vmatpush1.msra.mxu0 0.0
    %1123 = vmatprep.subr.mxu0 0.0
    %1124 = vmatpush1.msra.mxu0 0.0
    %1125 = vmatprep.subr.mxu0 0.0
    %1126 = vmatpush1.msra.mxu0 0.0
    %1127 = vmatprep.subr.mxu0 0.0
    %1128 = vmatpush1.msra.mxu0 0.0
    %1129 = vmatprep.subr.mxu0 0.0
    %1130 = vmatpush1.msra.mxu0 0.0
    %1131 = vmatprep.subr.mxu0 0.0
    %1132 = vmatpush1.msra.mxu0 0.0
    %1133 = vmatprep.subr.mxu0 0.0
    %1134 = vmatpush1.msra.mxu0 0.0
    %1135 = vmatprep.subr.mxu0 0.0
    %1136 = vmatpush1.msra.mxu0 0.0
    %1137 = vmatprep.subr.mxu0 0.0
    %1138 = vmatpush1.msra.mxu0 0.0
    %1139 = vmatprep.subr.mxu0 0.0
    %1140 = vmatpush1.msra.mxu0 0.0
    %1141 = vmatprep.subr.mxu0 0.0
    %1142 = vmatpush1.msra.mxu0 0.0
    %1143 = vmatprep.subr.mxu0 0.0
    %1144 = vmatpush1.msra.mxu0 0.0
    %1145 = vmatprep.subr.mxu0 0.0
    %1146 = vmatpush1.msra.mxu0 0.0
    %1147 = vmatprep.subr.mxu0 0.0
    %1148 = vmatpush1.msra.mxu0 0.0
    %1149 = vmatprep.subr.mxu0 0.0
    %1150 = vmatpush1.msra.mxu0 0.0
    %1151 = vmatprep.subr.mxu0 0.0
    %1152 = vmatpush1.msra.mxu0 0.0
    %1153 = vmatprep.subr.mxu0 0.0
    %1154 = vmatpush1.msra.mxu0 0.0
    %1155 = vmatprep.subr.mxu0 0.0
    %1156 = vmatpush1.msra.mxu0 0.0
    %1157 = vmatprep.subr.mxu0 0.0
    %1158 = vmatpush1.msra.mxu0 0.0
    %1159 = vmatprep.subr.mxu0 0.0
    %1160 = vmatpush1.msra.mxu0 0.0
    %1161 = vmatprep.subr.mxu0 0.0
    %1162 = vmatpush1.msra.mxu0 0.0
    %1163 = vmatprep.subr.mxu0 0.0
    %1164 = vmatpush1.msra.mxu0 0.0
    %1165 = vmatprep.subr.mxu0 0.0
    %1166 = vmatpush1.msra.mxu0 0.0
    %1167 = vmatprep.mubr.f32.mxu0 0.0
    %1168 = vmatmul.mubr.f32.gmra.mrb[0].mxu0 %v1098
    %v1169 = vpop.f32.mrb[0].mxu0
    %v1170 = vadd.f32 %v1089, %v1169
    %v1171 = vpop.f32.mrb[0].mxu0
    %v1172 = vadd.f32 %v1093, %v1171
    %1173 = vmatprep.mubr.f32.mxu0 0.0
    %1174 = vmatmul.mubr.f32.gmra.mrb[0].mxu0 %v1101
    %v1175 = vpop.f32.mrb[0].mxu0
    %v1176 = vadd.f32 %v1089, %v1175
    %v1177 = vpop.f32.mrb[0].mxu0
    %v1178 = vadd.f32 %v1093, %v1177
    %1179 = vdwg.mxu0
    %v1180 = vmax.f32 %v1170, 0.0
    %v1181 = vmax.f32 %v1172, 0.0
    %v1182 = vmax.f32 %v1176, 0.0
    %v1183 = vmax.f32 %v1178, 0.0
    %v1184 = vld [vmem:[#allocation13] sm:$0xff]
    %v1185 = vld [vmem:[#allocation13 + $0x8] sm:$0xff]
    %v1186 = vld [vmem:[#allocation13 + $0x10] sm:$0xff]
    %v1187 = vld [vmem:[#allocation13 + $0x18] sm:$0xff]
    %v1188 = vld [vmem:[#allocation13 + $0x20] sm:$0xff]
    %v1189 = vld [vmem:[#allocation13 + $0x28] sm:$0xff]
    %v1190 = vld [vmem:[#allocation13 + $0x30] sm:$0xff]
    %v1191 = vld [vmem:[#allocation13 + $0x38] sm:$0xff]
    %v1192 = vld [vmem:[#allocation13 + $0x40] sm:$0xff]
    %v1193 = vld [vmem:[#allocation13 + $0x48] sm:$0xff]
    %v1194 = vld [vmem:[#allocation13 + $0x50] sm:$0xff]
    %v1195 = vld [vmem:[#allocation13 + $0x58] sm:$0xff]
    %v1196 = vld [vmem:[#allocation13 + $0x60] sm:$0xff]
    %v1197 = vld [vmem:[#allocation13 + $0x68] sm:$0xff]
    %v1198 = vld [vmem:[#allocation13 + $0x70] sm:$0xff]
    %v1199 = vld [vmem:[#allocation13 + $0x78] sm:$0xff]
    %v1200 = vld [vmem:[#allocation13 + $0x80] sm:$0xff]
    %v1201 = vld [vmem:[#allocation13 + $0x88] sm:$0xff]
    %v1202 = vld [vmem:[#allocation13 + $0x90] sm:$0xff]
    %v1203 = vld [vmem:[#allocation13 + $0x98] sm:$0xff]
    %v1204 = vld [vmem:[#allocation13 + $0xa0] sm:$0xff]
    %v1205 = vld [vmem:[#allocation13 + $0xa8] sm:$0xff]
    %v1206 = vld [vmem:[#allocation13 + $0xb0] sm:$0xff]
    %v1207 = vld [vmem:[#allocation13 + $0xb8] sm:$0xff]
    %v1208 = vld [vmem:[#allocation13 + $0xc0] sm:$0xff]
    %v1209 = vld [vmem:[#allocation13 + $0xc8] sm:$0xff]
    %v1210 = vld [vmem:[#allocation13 + $0xd0] sm:$0xff]
    %v1211 = vld [vmem:[#allocation13 + $0xd8] sm:$0xff]
    %v1212 = vld [vmem:[#allocation13 + $0xe0] sm:$0xff]
    %v1213 = vld [vmem:[#allocation13 + $0xe8] sm:$0xff]
    %v1214 = vld [vmem:[#allocation13 + $0xf0] sm:$0xff]
    %v1215 = vld [vmem:[#allocation13 + $0xf8] sm:$0xff]
    %v1216 = vld [vmem:[#allocation13 + $0x100] sm:$0xff]
    %v1217 = vld [vmem:[#allocation13 + $0x108] sm:$0xff]
    %v1218 = vld [vmem:[#allocation13 + $0x110] sm:$0xff]
    %v1219 = vld [vmem:[#allocation13 + $0x118] sm:$0xff]
    %v1220 = vld [vmem:[#allocation13 + $0x120] sm:$0xff]
    %v1221 = vld [vmem:[#allocation13 + $0x128] sm:$0xff]
    %v1222 = vld [vmem:[#allocation13 + $0x130] sm:$0xff]
    %v1223 = vld [vmem:[#allocation13 + $0x138] sm:$0xff]
    %v1224 = vld [vmem:[#allocation13 + $0x140] sm:$0xff]
    %v1225 = vld [vmem:[#allocation13 + $0x148] sm:$0xff]
    %v1226 = vld [vmem:[#allocation13 + $0x150] sm:$0xff]
    %v1227 = vld [vmem:[#allocation13 + $0x158] sm:$0xff]
    %v1228 = vld [vmem:[#allocation13 + $0x160] sm:$0xff]
    %v1229 = vld [vmem:[#allocation13 + $0x168] sm:$0xff]
    %v1230 = vld [vmem:[#allocation13 + $0x170] sm:$0xff]
    %v1231 = vld [vmem:[#allocation13 + $0x178] sm:$0xff]
    %v1232 = vld [vmem:[#allocation13 + $0x180] sm:$0xff]
    %v1233 = vld [vmem:[#allocation13 + $0x188] sm:$0xff]
    %v1234 = vld [vmem:[#allocation13 + $0x190] sm:$0xff]
    %v1235 = vld [vmem:[#allocation13 + $0x198] sm:$0xff]
    %v1236 = vld [vmem:[#allocation13 + $0x1a0] sm:$0xff]
    %v1237 = vld [vmem:[#allocation13 + $0x1a8] sm:$0xff]
    %v1238 = vld [vmem:[#allocation13 + $0x1b0] sm:$0xff]
    %v1239 = vld [vmem:[#allocation13 + $0x1b8] sm:$0xff]
    %v1240 = vld [vmem:[#allocation13 + $0x1c0] sm:$0xff]
    %v1241 = vld [vmem:[#allocation13 + $0x1c8] sm:$0xff]
    %v1242 = vld [vmem:[#allocation13 + $0x1d0] sm:$0xff]
    %v1243 = vld [vmem:[#allocation13 + $0x1d8] sm:$0xff]
    %v1244 = vld [vmem:[#allocation13 + $0x1e0] sm:$0xff]
    %v1245 = vld [vmem:[#allocation13 + $0x1e8] sm:$0xff]
    %v1246 = vld [vmem:[#allocation13 + $0x1f0] sm:$0xff]
    %v1247 = vld [vmem:[#allocation13 + $0x1f8] sm:$0xff]
    %v1248 = vld [vmem:[%s11] sm:$0x3]
    %v1250 = vlaneseq
    %v1251 = vshrl.u32 %v1250, 7
    %v1252 = vsub.s32 0, %v1251
    %v1253 = vrot.slane %v1248, %v1252
    %v1254 = vlaneseq
    %v1255 = vshrl.u32 %v1254, 7
    %v1256 = vsub.s32 1, %v1255
    %v1257 = vrot.slane %v1248, %v1256
    %1260 = vmatprep.subr.mxu0 %v1185
    %1261 = vmatpush1.msra.mxu0 %v1184
    %1262 = vmatprep.subr.mxu0 %v1187
    %1263 = vmatpush1.msra.mxu0 %v1186
    %1264 = vmatprep.subr.mxu0 %v1189
    %1265 = vmatpush1.msra.mxu0 %v1188
    %1266 = vmatprep.subr.mxu0 %v1191
    %1267 = vmatpush1.msra.mxu0 %v1190
    %1268 = vmatprep.subr.mxu0 %v1193
    %1269 = vmatpush1.msra.mxu0 %v1192
    %1270 = vmatprep.subr.mxu0 %v1195
    %1271 = vmatpush1.msra.mxu0 %v1194
    %1272 = vmatprep.subr.mxu0 %v1197
    %1273 = vmatpush1.msra.mxu0 %v1196
    %1274 = vmatprep.subr.mxu0 %v1199
    %1275 = vmatpush1.msra.mxu0 %v1198
    %1276 = vmatprep.subr.mxu0 %v1201
    %1277 = vmatpush1.msra.mxu0 %v1200
    %1278 = vmatprep.subr.mxu0 %v1203
    %1279 = vmatpush1.msra.mxu0 %v1202
    %1280 = vmatprep.subr.mxu0 %v1205
    %1281 = vmatpush1.msra.mxu0 %v1204
    %1282 = vmatprep.subr.mxu0 %v1207
    %1283 = vmatpush1.msra.mxu0 %v1206
    %1284 = vmatprep.subr.mxu0 %v1209
    %1285 = vmatpush1.msra.mxu0 %v1208
    %1286 = vmatprep.subr.mxu0 %v1211
    %1287 = vmatpush1.msra.mxu0 %v1210
    %1288 = vmatprep.subr.mxu0 %v1213
    %1289 = vmatpush1.msra.mxu0 %v1212
    %1290 = vmatprep.subr.mxu0 %v1215
    %1291 = vmatpush1.msra.mxu0 %v1214
    %1292 = vmatprep.subr.mxu0 %v1217
    %1293 = vmatpush1.msra.mxu0 %v1216
    %1294 = vmatprep.subr.mxu0 %v1219
    %1295 = vmatpush1.msra.mxu0 %v1218
    %1296 = vmatprep.subr.mxu0 %v1221
    %1297 = vmatpush1.msra.mxu0 %v1220
    %1298 = vmatprep.subr.mxu0 %v1223
    %1299 = vmatpush1.msra.mxu0 %v1222
    %1300 = vmatprep.subr.mxu0 %v1225
    %1301 = vmatpush1.msra.mxu0 %v1224
    %1302 = vmatprep.subr.mxu0 %v1227
    %1303 = vmatpush1.msra.mxu0 %v1226
    %1304 = vmatprep.subr.mxu0 %v1229
    %1305 = vmatpush1.msra.mxu0 %v1228
    %1306 = vmatprep.subr.mxu0 %v1231
    %1307 = vmatpush1.msra.mxu0 %v1230
    %1308 = vmatprep.subr.mxu0 %v1233
    %1309 = vmatpush1.msra.mxu0 %v1232
    %1310 = vmatprep.subr.mxu0 %v1235
    %1311 = vmatpush1.msra.mxu0 %v1234
    %1312 = vmatprep.subr.mxu0 %v1237
    %1313 = vmatpush1.msra.mxu0 %v1236
    %1314 = vmatprep.subr.mxu0 %v1239
    %1315 = vmatpush1.msra.mxu0 %v1238
    %1316 = vmatprep.subr.mxu0 %v1241
    %1317 = vmatpush1.msra.mxu0 %v1240
    %1318 = vmatprep.subr.mxu0 %v1243
    %1319 = vmatpush1.msra.mxu0 %v1242
    %1320 = vmatprep.subr.mxu0 %v1245
    %1321 = vmatpush1.msra.mxu0 %v1244
    %1322 = vmatprep.subr.mxu0 %v1247
    %1323 = vmatpush1.msra.mxu0 %v1246
    %1324 = vmatprep.mubr.f32.mxu0 %v1181
    %1325 = vmatmul.mubr.f32.gmra.mrb[0].mxu0 %v1180
    %v1326 = vpop.f32.mrb[0].mxu0
    %v1327 = vadd.f32 %v1253, %v1326
    %v1328 = vpop.f32.mrb[0].mxu0
    %v1329 = vadd.f32 %v1257, %v1328
    %1330 = vmatprep.mubr.f32.mxu0 %v1183
    %1331 = vmatmul.mubr.f32.gmra.mrb[0].mxu0 %v1182
    %v1332 = vpop.f32.mrb[0].mxu0
    %v1333 = vadd.f32 %v1253, %v1332
    %v1334 = vpop.f32.mrb[0].mxu0
    %v1335 = vadd.f32 %v1257, %v1334
    %1336 = vdwg.mxu0
    %v1337 = vmax.f32 %v1327, 0.0
    %v1338 = vmax.f32 %v1329, 0.0
    %v1339 = vmax.f32 %v1333, 0.0
    %v1340 = vmax.f32 %v1335, 0.0
    %v1341 = vld [vmem:[%s12] sm:$0xff]
    %v1342 = vld [vmem:[%s12 + $0x8] sm:$0xff]
    %v1343 = vld [vmem:[%s12 + $0x10] sm:$0xff]
    %v1344 = vld [vmem:[%s12 + $0x18] sm:$0xff]
    %v1345 = vld [vmem:[%s12 + $0x20] sm:$0xff]
    %v1346 = vld [vmem:[%s12 + $0x28] sm:$0xff]
    %v1347 = vld [vmem:[%s12 + $0x30] sm:$0xff]
    %v1348 = vld [vmem:[%s12 + $0x38] sm:$0xff]
    %v1349 = vld [vmem:[%s12 + $0x40] sm:$0xff]
    %v1350 = vld [vmem:[%s12 + $0x48] sm:$0xff]
    %v1351 = vld [vmem:[%s12 + $0x50] sm:$0xff]
    %v1352 = vld [vmem:[%s12 + $0x58] sm:$0xff]
    %v1353 = vld [vmem:[%s12 + $0x60] sm:$0xff]
    %v1354 = vld [vmem:[%s12 + $0x68] sm:$0xff]
    %v1355 = vld [vmem:[%s12 + $0x70] sm:$0xff]
    %v1356 = vld [vmem:[%s12 + $0x78] sm:$0xff]
    %v1357 = vld [vmem:[%s12 + $0x80] sm:$0xff]
    %v1358 = vld [vmem:[%s12 + $0x88] sm:$0xff]
    %v1359 = vld [vmem:[%s12 + $0x90] sm:$0xff]
    %v1360 = vld [vmem:[%s12 + $0x98] sm:$0xff]
    %v1361 = vld [vmem:[%s12 + $0xa0] sm:$0xff]
    %v1362 = vld [vmem:[%s12 + $0xa8] sm:$0xff]
    %v1363 = vld [vmem:[%s12 + $0xb0] sm:$0xff]
    %v1364 = vld [vmem:[%s12 + $0xb8] sm:$0xff]
    %v1365 = vld [vmem:[%s12 + $0xc0] sm:$0xff]
    %v1366 = vld [vmem:[%s12 + $0xc8] sm:$0xff]
    %v1367 = vld [vmem:[%s12 + $0xd0] sm:$0xff]
    %v1368 = vld [vmem:[%s12 + $0xd8] sm:$0xff]
    %v1369 = vld [vmem:[%s12 + $0xe0] sm:$0xff]
    %v1370 = vld [vmem:[%s12 + $0xe8] sm:$0xff]
    %v1371 = vld [vmem:[%s12 + $0xf0] sm:$0xff]
    %v1372 = vld [vmem:[%s12 + $0xf8] sm:$0xff]
    %v1373 = vld [vmem:[#allocation14] sm:$0x1]
    %v1375 = vlaneseq
    %v1376 = vshrl.u32 %v1375, 7
    %v1377 = vsub.s32 0, %v1376
    %v1378 = vrot.slane %v1373, %v1377
    %1380 = vmatprep.subr.mxu0 0.0
    %1381 = vmatpush1.msra.mxu0 %v1341
    %1382 = vmatprep.subr.mxu0 0.0
    %1383 = vmatpush1.msra.mxu0 %v1342
    %1384 = vmatprep.subr.mxu0 0.0
    %1385 = vmatpush1.msra.mxu0 %v1343
    %1386 = vmatprep.subr.mxu0 0.0
    %1387 = vmatpush1.msra.mxu0 %v1344
    %1388 = vmatprep.subr.mxu0 0.0
    %1389 = vmatpush1.msra.mxu0 %v1345
    %1390 = vmatprep.subr.mxu0 0.0
    %1391 = vmatpush1.msra.mxu0 %v1346
    %1392 = vmatprep.subr.mxu0 0.0
    %1393 = vmatpush1.msra.mxu0 %v1347
    %1394 = vmatprep.subr.mxu0 0.0
    %1395 = vmatpush1.msra.mxu0 %v1348
    %1396 = vmatprep.subr.mxu0 0.0
    %1397 = vmatpush1.msra.mxu0 %v1349
    %1398 = vmatprep.subr.mxu0 0.0
    %1399 = vmatpush1.msra.mxu0 %v1350
    %1400 = vmatprep.subr.mxu0 0.0
    %1401 = vmatpush1.msra.mxu0 %v1351
    %1402 = vmatprep.subr.mxu0 0.0
    %1403 = vmatpush1.msra.mxu0 %v1352
    %1404 = vmatprep.subr.mxu0 0.0
    %1405 = vmatpush1.msra.mxu0 %v1353
    %1406 = vmatprep.subr.mxu0 0.0
    %1407 = vmatpush1.msra.mxu0 %v1354
    %1408 = vmatprep.subr.mxu0 0.0
    %1409 = vmatpush1.msra.mxu0 %v1355
    %1410 = vmatprep.subr.mxu0 0.0
    %1411 = vmatpush1.msra.mxu0 %v1356
    %1412 = vmatprep.subr.mxu0 0.0
    %1413 = vmatpush1.msra.mxu0 %v1357
    %1414 = vmatprep.subr.mxu0 0.0
    %1415 = vmatpush1.msra.mxu0 %v1358
    %1416 = vmatprep.subr.mxu0 0.0
    %1417 = vmatpush1.msra.mxu0 %v1359
    %1418 = vmatprep.subr.mxu0 0.0
    %1419 = vmatpush1.msra.mxu0 %v1360
    %1420 = vmatprep.subr.mxu0 0.0
    %1421 = vmatpush1.msra.mxu0 %v1361
    %1422 = vmatprep.subr.mxu0 0.0
    %1423 = vmatpush1.msra.mxu0 %v1362
    %1424 = vmatprep.subr.mxu0 0.0
    %1425 = vmatpush1.msra.mxu0 %v1363
    %1426 = vmatprep.subr.mxu0 0.0
    %1427 = vmatpush1.msra.mxu0 %v1364
    %1428 = vmatprep.subr.mxu0 0.0
    %1429 = vmatpush1.msra.mxu0 %v1365
    %1430 = vmatprep.subr.mxu0 0.0
    %1431 = vmatpush1.msra.mxu0 %v1366
    %1432 = vmatprep.subr.mxu0 0.0
    %1433 = vmatpush1.msra.mxu0 %v1367
    %1434 = vmatprep.subr.mxu0 0.0
    %1435 = vmatpush1.msra.mxu0 %v1368
    %1436 = vmatprep.subr.mxu0 0.0
    %1437 = vmatpush1.msra.mxu0 %v1369
    %1438 = vmatprep.subr.mxu0 0.0
    %1439 = vmatpush1.msra.mxu0 %v1370
    %1440 = vmatprep.subr.mxu0 0.0
    %1441 = vmatpush1.msra.mxu0 %v1371
    %1442 = vmatprep.subr.mxu0 0.0
    %1443 = vmatpush1.msra.mxu0 %v1372
    %1444 = vmatprep.mubr.f32.mxu0 %v1338
    %1445 = vmatmul.mubr.f32.gmra.mrb[0].mxu0 %v1337
    %v1446 = vpop.f32.mrb[0].mxu0
    %v1447 = vadd.f32 %v1378, %v1446
    %v1448 = vpop.f32.mrb[0].mxu0
    %1449 = vmatprep.mubr.f32.mxu0 %v1340
    %1450 = vmatmul.mubr.f32.gmra.mrb[0].mxu0 %v1339
    %v1451 = vpop.f32.mrb[0].mxu0
    %v1452 = vadd.f32 %v1378, %v1451
    %v1453 = vpop.f32.mrb[0].mxu0
    %1454 = vdwg.mxu0
    %v1455 = vlaneseq
    %v1456 = vand.u32 %v1455, 127
    %v1457 = vmax.f32 %v1447, -20.0
    %v1458 = vmax.f32 %v1452, -20.0
    %v1459 = vmin.f32 %v1457, 2.0
    %v1460 = vmin.f32 %v1458, 2.0
    %vm1461 = vcmp.ge.s32.totalorder %v1456, 4
    %v1462 = vsel %vm1461, %v1459, %v1447
    %v1463 = vsel %vm1461, %v1460, %v1452
    %1464 = vst [vmem:[#allocation16] sm:$0xff] %v1462
    %1465 = vst [vmem:[#allocation16 + $0x8] sm:$0xff] %v1463
    // Predicated region
    $region82: #{tpu_custom_call.1} parent=1 // pred_check
      _
    $region83: #{tpu_custom_call.1} parent=1 // pred_check_branch
      %1467 = sbr.rel (0) target = $region85
    $region84: #{tpu_custom_call.1} parent=1 // pred_region
      %s1469 = ssub.s32 256, 256
      %1470 = vsyncadd [#allocation7], %s1469
      %s1471 = sshll.u32 [#allocation16], 4
      %s1472 = int_to_ptr.vmem [resolvable:$true] %s1471
      %1477 = dma.vmem_to_hbm [thread:$0]  %s1472, 256, %s14, [#allocation7], 128, 128, 8
    $region85: #{tpu_custom_call.1} parent=1 // pred_fallthru
      _
    // Predicated region
    $region86: #{tpu_custom_call.1} parent=1 // pred_check
      _
    $region87: #{tpu_custom_call.1} parent=1 // pred_check_branch
      %1479 = sbr.rel (0) target = $region89
    $region88: #{tpu_custom_call.1} parent=1 // pred_region
      %1480 = dma.done [#allocation7], 256
    $region89: #{tpu_custom_call.1} parent=1 // pred_fallthru
      _
    %1481 = vsyncpa [#allocation6], 1
    %1482 = vsyncpa [#allocation9], 1
    %1483 = vsyncpa [#allocation12], 1
    %1484 = vsyncpa [#allocation15], 1
    %1485 = vsyncpa [#allocation7], 1

</llo_original>
